<compile_context>
chip_gen: v7x
topology: tpu7x:2x2x1
jax: 0.10.0
libtpu: 0.0.40
codegen_flags: <defaults>
</compile_context>

<pallas_src>
import functools

import jax
import jax.numpy as jnp
from jax import lax
from jax.experimental import pallas as pl
from jax.experimental.pallas import tpu as pltpu

EPS = 1e-5  # nn.BatchNorm2d default eps


def _conv_stats_kernel(xt_ref, w_ref, y_ref, s_ref):
    """3x3 conv on one halo tile + per-tile BN partial sums.

    xt_ref: (TH+2, W+2, Cin)  bf16 input tile (includes 1-pixel halo rows/cols)
    w_ref : (9*Cin, Coutp)    bf16 fused weights (tap-major rows)
    y_ref : (TH*W, Coutp)     f32 conv output tile (lane-dense, Coutp % 128 == 0)
    s_ref : (2, Coutp)        f32 [sum, sum-of-squares] over this tile's pixels
    """
    thp2, wp2, cin = xt_ref.shape
    th, w = thp2 - 2, wp2 - 2
    p = th * w

    # In-VMEM im2col: 9 shifted (TH, W, Cin) slices -> one (P, 9*Cin) operand,
    # so the conv is a single MXU dot instead of 9 tiny-K dots.
    cols = []
    for dy in range(3):
        for dx in range(3):
            cols.append(xt_ref[dy:dy + th, dx:dx + w, :].reshape(p, cin))
    patch = jnp.concatenate(cols, axis=-1)                       # (P, 9*Cin)

    acc = jnp.dot(patch, w_ref[...],
                  preferred_element_type=jnp.float32)            # (P, Coutp) f32

    y_ref[...] = acc

    # Streaming BN statistics: per-tile partial sums only (reduced in wrapper).
    s_ref[...] = jnp.concatenate(
        [jnp.sum(acc, axis=0, keepdims=True),
         jnp.sum(acc * acc, axis=0, keepdims=True)], axis=0)     # (2, Coutp)


def _bn_relu_kernel(y_ref, scale_ref, shift_ref, o_ref):
    """Lane-dense y*scale + shift, then ReLU."""
    y = y_ref[...]                                               # (P, Coutp) f32
    o_ref[...] = jnp.maximum(
        y * scale_ref[...] + shift_ref[...], 0.0).astype(o_ref.dtype)


def _pick_tile_h(H, W):
    """Largest divisor of H whose tile has <= ~512 output rows."""
    best = 1
    for th in range(1, H + 1):
        if H % th == 0 and th * W <= max(512, W):
            best = th
    return best


@functools.partial(jax.jit, static_argnames=("tile_h", "compute_dtype"))
def signle_conv(x_nchw, weight, bias, gamma, beta, *,
                tile_h=None, compute_dtype=jnp.bfloat16):
    """Forward pass of SignleConv.

    x_nchw: (N, Cin, H, W); weight: (Cout, Cin, 3, 3); bias/gamma/beta: (Cout,)
    Returns (N, Cout, H, W).

    `bias` is accepted for API parity but unused: with training-mode BatchNorm
    the per-channel conv bias is removed again by the mean subtraction, so
    dropping it does not change the output.
    """
    N, Cin, H, W = x_nchw.shape
    Cout = weight.shape[0]
    del bias  # cancels exactly under training-mode BatchNorm

    th = _pick_tile_h(H, W) if tile_h is None else tile_h
    assert H % th == 0, "tile_h must divide H"
    n_h = H // th
    P = th * W
    Coutp = ((Cout + 127) // 128) * 128   # lane-dense channel dimension

    # ---- wrapper-side glue (layout only) --------------------------------
    # TODO(synk): if the surrounding model runs NHWC end-to-end, feed NHWC
    # directly and drop this transpose (it is only an NCHW adapter for the
    # PyTorch interface).
    x_nhwc = jnp.transpose(x_nchw, (0, 2, 3, 1)).astype(compute_dtype)
    x_pad = jnp.pad(x_nhwc, ((0, 0), (1, 1), (1, 1), (0, 0)))
    # Pre-gathered halo tiles (N, n_h, th+2, W+2, Cin): duplicates only the two
    # halo rows per tile, so BlockSpec blocks never need to overlap.
    rows = jnp.arange(n_h)[:, None] * th + jnp.arange(th + 2)[None, :]
    x_tiles = x_pad[:, rows]

    # (Cout, Cin, ky, kx) -> (ky, kx, Cin, Cout) -> (9*Cin, Cout); row block
    # [tap*Cin:(tap+1)*Cin] holds the weights of spatial tap = ky*3 + kx, which
    # matches the column order of the in-kernel im2col patch.  Pad Cout -> Coutp.
    w_mat = jnp.transpose(weight, (2, 3, 1, 0)).reshape(9 * Cin, Cout)
    w_mat = jnp.pad(w_mat, ((0, 0), (0, Coutp - Cout))).astype(compute_dtype)
    gamma_p = jnp.pad(gamma.astype(jnp.float32), (0, Coutp - Cout))
    beta_p = jnp.pad(beta.astype(jnp.float32), (0, Coutp - Cout))

    cparams = pltpu.CompilerParams(
        dimension_semantics=("parallel", "parallel"),
        vmem_limit_bytes=32 * 1024 * 1024,
    )

    # ---- pass 1: conv (single fused-K dot) + per-tile BN partial stats ---
    y_conv, stats = pl.pallas_call(
        _conv_stats_kernel,
        out_shape=(
            jax.ShapeDtypeStruct((N, n_h, P, Coutp), jnp.float32),
            jax.ShapeDtypeStruct((N, n_h, 2, Coutp), jnp.float32),
        ),
        grid=(N, n_h),
        in_specs=[
            pl.BlockSpec((None, None, th + 2, W + 2, Cin),
                         lambda n, j: (n, j, 0, 0, 0)),
            pl.BlockSpec((9 * Cin, Coutp), lambda n, j: (0, 0)),
        ],
        out_specs=(
            pl.BlockSpec((None, None, P, Coutp), lambda n, j: (n, j, 0, 0)),
            pl.BlockSpec((None, None, 2, Coutp), lambda n, j: (n, j, 0, 0)),
        ),
        compiler_params=cparams,
    )(x_tiles, w_mat)

    # ---- tiny cross-tile reduction -> BN scale/shift (wrapper, f32) ------
    count = float(N * H * W)
    sums = jnp.sum(stats[:, :, 0, :], axis=(0, 1))          # (Coutp,)
    sumsq = jnp.sum(stats[:, :, 1, :], axis=(0, 1))
    mean = sums / count
    # E[x^2] - E[x]^2 in f32 (fine for these sizes; clamp guards tiny negatives)
    var = jnp.maximum(sumsq / count - mean * mean, 0.0)
    inv_std = lax.rsqrt(var + EPS)
    scale = (gamma_p * inv_std).reshape(1, Coutp)
    shift = (beta_p - mean * gamma_p * inv_std).reshape(1, Coutp)

    # ---- pass 2: normalize + ReLU (lane-dense elementwise) ---------------
    out_t = pl.pallas_call(
        _bn_relu_kernel,
        out_shape=jax.ShapeDtypeStruct((N, n_h, P, Coutp), x_nchw.dtype),
        grid=(N, n_h),
        in_specs=[
            pl.BlockSpec((None, None, P, Coutp), lambda n, j: (n, j, 0, 0)),
            pl.BlockSpec((1, Coutp), lambda n, j: (0, 0)),
            pl.BlockSpec((1, Coutp), lambda n, j: (0, 0)),
        ],
        out_specs=pl.BlockSpec((None, None, P, Coutp),
                               lambda n, j: (n, j, 0, 0)),
        compiler_params=cparams,
    )(y_conv, scale, shift)

    # (N, n_h, th*W, Coutp) -> drop channel padding -> (N, Cout, H, W)
    out_t = out_t[..., :Cout]
    out = out_t.reshape(N, n_h, th, W, Cout)
    out = jnp.transpose(out, (0, 4, 1, 2, 3)).reshape(N, Cout, H, W)
    return out


def _reference(x_nchw, weight, bias, gamma, beta, compute_dtype=jnp.bfloat16):
    """Pure-JAX reference (conv + training-mode BN + ReLU).

    Conv operands are rounded to `compute_dtype` (the kernel's MXU operand
    precision) but the conv itself runs in exact f32, so this isolates any
    structural error in the kernel from expected bf16 operand rounding.
    """
    xr = x_nchw.astype(compute_dtype).astype(jnp.float32)
    wr = weight.astype(compute_dtype).astype(jnp.float32)
    y = lax.conv_general_dilated(
        xr, wr, window_strides=(1, 1), padding=((1, 1), (1, 1)),
        dimension_numbers=("NCHW", "OIHW", "NCHW"),
        precision=lax.Precision.HIGHEST)
    y = y + bias.reshape(1, -1, 1, 1)
    mean = jnp.mean(y, axis=(0, 2, 3), keepdims=True)
    var = jnp.mean((y - mean) ** 2, axis=(0, 2, 3), keepdims=True)
    y = (y - mean) * lax.rsqrt(var + EPS)
    y = y * gamma.reshape(1, -1, 1, 1) + beta.reshape(1, -1, 1, 1)
    return jnp.maximum(y, 0.0)


if __name__ == "__main__":
    N, Cin, Cout, H, W = 2, 4, 8, 16, 16

    key = jax.random.PRNGKey(0)
    kx, kw, kb = jax.random.split(key, 3)

    x = jax.random.normal(kx, (N, Cin, H, W), dtype=jnp.float32)
    weight = jax.random.normal(kw, (Cout, Cin, 3, 3), dtype=jnp.float32) * 0.1
    bias = jax.random.normal(kb, (Cout,), dtype=jnp.float32) * 0.1
    gamma = jnp.ones((Cout,), dtype=jnp.float32)   # BN weight init
    beta = jnp.zeros((Cout,), dtype=jnp.float32)   # BN bias init

    # tile_h=8 -> grid (2 batches x 2 H-tiles), 128 output rows per tile.
    out = signle_conv(x, weight, bias, gamma, beta, tile_h=8)
    out = jax.block_until_ready(out)

    ref = _reference(x, weight, bias, gamma, beta)
    assert out.shape == (N, Cout, H, W)
    max_err = float(jnp.max(jnp.abs(out - ref)))
    assert jnp.allclose(out, ref, atol=1e-3, rtol=1e-3), f"mismatch: {max_err}"

    print("KERNEL_OK")
</pallas_src>

<mosaic_0001>
module attributes {stable_mosaic.version = 11 : i64} {
  func.func @_conv_stats_kernel(%arg0: i32, %arg1: i32, %arg2: memref<1x1x10x18x4xbf16, #tpu.memory_space<vmem>>, %arg3: memref<36x128xbf16, #tpu.memory_space<vmem>>, %arg4: memref<1x1x128x128xf32, #tpu.memory_space<vmem>>, %arg5: memref<1x1x2x128xf32, #tpu.memory_space<vmem>>) attributes {dimension_semantics = [#tpu.dimension_semantics<parallel>, #tpu.dimension_semantics<parallel>], iteration_bounds = array<i64: 2, 2>, scalar_prefetch = 0 : i64, scratch_operands = 0 : i64, tpu.core_type = #tpu.core_type<tc>, window_params = [{transform_indices = @transform_0, window_bounds = array<i64: 1, 1, 10, 18, 4>}, {pipeline_mode = #tpu.pipeline_mode<synchronous>, transform_indices = @transform_1, window_bounds = array<i64: 36, 128>}, {transform_indices = @transform_2, window_bounds = array<i64: 1, 1, 128, 128>}, {transform_indices = @transform_3, window_bounds = array<i64: 1, 1, 2, 128>}]} {
    %c0 = arith.constant 0 : index
    %c0_0 = arith.constant 0 : index
    %c0_1 = arith.constant 0 : index
    %c0_2 = arith.constant 0 : index
    %c0_3 = arith.constant 0 : index
    %0 = vector.load %arg2[%c0, %c0_0, %c0_1, %c0_2, %c0_3] : memref<1x1x10x18x4xbf16, #tpu.memory_space<vmem>>, vector<1x1x8x16x4xbf16>
    %1 = vector.shape_cast %0 : vector<1x1x8x16x4xbf16> to vector<8x16x4xbf16>
    %2 = vector.shape_cast %1 : vector<8x16x4xbf16> to vector<128x4xbf16>
    %c0_4 = arith.constant 0 : index
    %c0_5 = arith.constant 0 : index
    %c0_6 = arith.constant 0 : index
    %c1 = arith.constant 1 : index
    %c0_7 = arith.constant 0 : index
    %3 = vector.load %arg2[%c0_4, %c0_5, %c0_6, %c1, %c0_7] : memref<1x1x10x18x4xbf16, #tpu.memory_space<vmem>>, vector<1x1x8x16x4xbf16>
    %4 = vector.shape_cast %3 : vector<1x1x8x16x4xbf16> to vector<8x16x4xbf16>
    %5 = vector.shape_cast %4 : vector<8x16x4xbf16> to vector<128x4xbf16>
    %c0_8 = arith.constant 0 : index
    %c0_9 = arith.constant 0 : index
    %c0_10 = arith.constant 0 : index
    %c2 = arith.constant 2 : index
    %c0_11 = arith.constant 0 : index
    %6 = vector.load %arg2[%c0_8, %c0_9, %c0_10, %c2, %c0_11] : memref<1x1x10x18x4xbf16, #tpu.memory_space<vmem>>, vector<1x1x8x16x4xbf16>
    %7 = vector.shape_cast %6 : vector<1x1x8x16x4xbf16> to vector<8x16x4xbf16>
    %8 = vector.shape_cast %7 : vector<8x16x4xbf16> to vector<128x4xbf16>
    %c0_12 = arith.constant 0 : index
    %c0_13 = arith.constant 0 : index
    %c1_14 = arith.constant 1 : index
    %c0_15 = arith.constant 0 : index
    %c0_16 = arith.constant 0 : index
    %9 = vector.load %arg2[%c0_12, %c0_13, %c1_14, %c0_15, %c0_16] : memref<1x1x10x18x4xbf16, #tpu.memory_space<vmem>>, vector<1x1x8x16x4xbf16>
    %10 = vector.shape_cast %9 : vector<1x1x8x16x4xbf16> to vector<8x16x4xbf16>
    %11 = vector.shape_cast %10 : vector<8x16x4xbf16> to vector<128x4xbf16>
    %c0_17 = arith.constant 0 : index
    %c0_18 = arith.constant 0 : index
    %c1_19 = arith.constant 1 : index
    %c1_20 = arith.constant 1 : index
    %c0_21 = arith.constant 0 : index
    %12 = vector.load %arg2[%c0_17, %c0_18, %c1_19, %c1_20, %c0_21] : memref<1x1x10x18x4xbf16, #tpu.memory_space<vmem>>, vector<1x1x8x16x4xbf16>
    %13 = vector.shape_cast %12 : vector<1x1x8x16x4xbf16> to vector<8x16x4xbf16>
    %14 = vector.shape_cast %13 : vector<8x16x4xbf16> to vector<128x4xbf16>
    %c0_22 = arith.constant 0 : index
    %c0_23 = arith.constant 0 : index
    %c1_24 = arith.constant 1 : index
    %c2_25 = arith.constant 2 : index
    %c0_26 = arith.constant 0 : index
    %15 = vector.load %arg2[%c0_22, %c0_23, %c1_24, %c2_25, %c0_26] : memref<1x1x10x18x4xbf16, #tpu.memory_space<vmem>>, vector<1x1x8x16x4xbf16>
    %16 = vector.shape_cast %15 : vector<1x1x8x16x4xbf16> to vector<8x16x4xbf16>
    %17 = vector.shape_cast %16 : vector<8x16x4xbf16> to vector<128x4xbf16>
    %c0_27 = arith.constant 0 : index
    %c0_28 = arith.constant 0 : index
    %c2_29 = arith.constant 2 : index
    %c0_30 = arith.constant 0 : index
    %c0_31 = arith.constant 0 : index
    %18 = vector.load %arg2[%c0_27, %c0_28, %c2_29, %c0_30, %c0_31] : memref<1x1x10x18x4xbf16, #tpu.memory_space<vmem>>, vector<1x1x8x16x4xbf16>
    %19 = vector.shape_cast %18 : vector<1x1x8x16x4xbf16> to vector<8x16x4xbf16>
    %20 = vector.shape_cast %19 : vector<8x16x4xbf16> to vector<128x4xbf16>
    %c0_32 = arith.constant 0 : index
    %c0_33 = arith.constant 0 : index
    %c2_34 = arith.constant 2 : index
    %c1_35 = arith.constant 1 : index
    %c0_36 = arith.constant 0 : index
    %21 = vector.load %arg2[%c0_32, %c0_33, %c2_34, %c1_35, %c0_36] : memref<1x1x10x18x4xbf16, #tpu.memory_space<vmem>>, vector<1x1x8x16x4xbf16>
    %22 = vector.shape_cast %21 : vector<1x1x8x16x4xbf16> to vector<8x16x4xbf16>
    %23 = vector.shape_cast %22 : vector<8x16x4xbf16> to vector<128x4xbf16>
    %c0_37 = arith.constant 0 : index
    %c0_38 = arith.constant 0 : index
    %c2_39 = arith.constant 2 : index
    %c2_40 = arith.constant 2 : index
    %c0_41 = arith.constant 0 : index
    %24 = vector.load %arg2[%c0_37, %c0_38, %c2_39, %c2_40, %c0_41] : memref<1x1x10x18x4xbf16, #tpu.memory_space<vmem>>, vector<1x1x8x16x4xbf16>
    %25 = vector.shape_cast %24 : vector<1x1x8x16x4xbf16> to vector<8x16x4xbf16>
    %26 = vector.shape_cast %25 : vector<8x16x4xbf16> to vector<128x4xbf16>
    %27 = tpu.concatenate %2, %5, %8, %11, %14, %17, %20, %23, %26 in 1 : vector<128x4xbf16>, vector<128x4xbf16>, vector<128x4xbf16>, vector<128x4xbf16>, vector<128x4xbf16>, vector<128x4xbf16>, vector<128x4xbf16>, vector<128x4xbf16>, vector<128x4xbf16> -> vector<128x36xbf16>
    %c0_42 = arith.constant 0 : index
    %c0_43 = arith.constant 0 : index
    %28 = vector.load %arg3[%c0_42, %c0_43] : memref<36x128xbf16, #tpu.memory_space<vmem>>, vector<36x128xbf16>
    %cst = arith.constant dense<0.000000e+00> : vector<128x128xf32>
    %29 = tpu.matmul %27, %28, %cst {dimension_numbers = #tpu.dot_dimension_numbers<[1], [0], [0], [1], [0, 0, 1, 1], [], []>} : vector<128x36xbf16>, vector<36x128xbf16>, vector<128x128xf32> -> vector<128x128xf32>
    %c0_44 = arith.constant 0 : index
    %c0_45 = arith.constant 0 : index
    %c0_46 = arith.constant 0 : index
    %c0_47 = arith.constant 0 : index
    %30 = vector.load %arg4[%c0_44, %c0_45, %c0_46, %c0_47] : memref<1x1x128x128xf32, #tpu.memory_space<vmem>>, vector<1x1x128x128xf32>
    %31 = vector.shape_cast %30 : vector<1x1x128x128xf32> to vector<128x128xf32>
    %32 = vector.shape_cast %29 : vector<128x128xf32> to vector<1x1x128x128xf32>
    tpu.vector_store %arg4[%c0_44, %c0_45, %c0_46, %c0_47], %32 {strides = array<i32>} : memref<1x1x128x128xf32, #tpu.memory_space<vmem>>, vector<1x1x128x128xf32>,
    %cst_48 = arith.constant dense<0.000000e+00> : vector<128xf32>
    %33 = vector.multi_reduction <add>, %29, %cst_48 [0] : vector<128x128xf32> to vector<128xf32>
    %34 = vector.shape_cast %33 : vector<128xf32> to vector<1x128xf32>
    %35 = arith.mulf %29, %29 : vector<128x128xf32>
    %cst_49 = arith.constant dense<0.000000e+00> : vector<128xf32>
    %36 = vector.multi_reduction <add>, %35, %cst_49 [0] : vector<128x128xf32> to vector<128xf32>
    %37 = vector.shape_cast %36 : vector<128xf32> to vector<1x128xf32>
    %38 = tpu.concatenate %34, %37 in 0 : vector<1x128xf32>, vector<1x128xf32> -> vector<2x128xf32>
    %c0_50 = arith.constant 0 : index
    %c0_51 = arith.constant 0 : index
    %c0_52 = arith.constant 0 : index
    %c0_53 = arith.constant 0 : index
    %39 = vector.load %arg5[%c0_50, %c0_51, %c0_52, %c0_53] : memref<1x1x2x128xf32, #tpu.memory_space<vmem>>, vector<1x1x2x128xf32>
    %40 = vector.shape_cast %39 : vector<1x1x2x128xf32> to vector<2x128xf32>
    %41 = vector.shape_cast %38 : vector<2x128xf32> to vector<1x1x2x128xf32>
    tpu.vector_store %arg5[%c0_50, %c0_51, %c0_52, %c0_53], %41 {strides = array<i32>} : memref<1x1x2x128xf32, #tpu.memory_space<vmem>>, vector<1x1x2x128xf32>,
    return
  }
  func.func @transform_0(%arg0: i32, %arg1: i32) -> (i32, i32, i32, i32, i32) {
    %c0_i32 = arith.constant 0 : i32
    %c0_i32_0 = arith.constant 0 : i32
    %c0_i32_1 = arith.constant 0 : i32
    %c0_i32_2 = arith.constant 0 : i32
    return %arg0, %arg1, %c0_i32, %c0_i32_0, %c0_i32_1 : i32, i32, i32, i32, i32
  }
  func.func @transform_1(%arg0: i32, %arg1: i32) -> (i32, i32) {
    %c0_i32 = arith.constant 0 : i32
    %c0_i32_0 = arith.constant 0 : i32
    %c0_i32_1 = arith.constant 0 : i32
    return %c0_i32, %c0_i32_0 : i32, i32
  }
  func.func @transform_2(%arg0: i32, %arg1: i32) -> (i32, i32, i32, i32) {
    %c0_i32 = arith.constant 0 : i32
    %c0_i32_0 = arith.constant 0 : i32
    %c0_i32_1 = arith.constant 0 : i32
    return %arg0, %arg1, %c0_i32, %c0_i32_0 : i32, i32, i32, i32
  }
  func.func @transform_3(%arg0: i32, %arg1: i32) -> (i32, i32, i32, i32) {
    %c0_i32 = arith.constant 0 : i32
    %c0_i32_0 = arith.constant 0 : i32
    %c0_i32_1 = arith.constant 0 : i32
    return %arg0, %arg1, %c0_i32, %c0_i32_0 : i32, i32, i32, i32
  }
}

module attributes {stable_mosaic.version = 11 : i64} {
  func.func @_bn_relu_kernel(%arg0: i32, %arg1: i32, %arg2: memref<1x1x128x128xf32, #tpu.memory_space<vmem>>, %arg3: memref<1x128xf32, #tpu.memory_space<vmem>>, %arg4: memref<1x128xf32, #tpu.memory_space<vmem>>, %arg5: memref<1x1x128x128xf32, #tpu.memory_space<vmem>>) attributes {dimension_semantics = [#tpu.dimension_semantics<parallel>, #tpu.dimension_semantics<parallel>], iteration_bounds = array<i64: 2, 2>, scalar_prefetch = 0 : i64, scratch_operands = 0 : i64, tpu.core_type = #tpu.core_type<tc>, window_params = [{transform_indices = @transform_0, window_bounds = array<i64: 1, 1, 128, 128>}, {pipeline_mode = #tpu.pipeline_mode<synchronous>, transform_indices = @transform_1, window_bounds = array<i64: 1, 128>}, {pipeline_mode = #tpu.pipeline_mode<synchronous>, transform_indices = @transform_2, window_bounds = array<i64: 1, 128>}, {transform_indices = @transform_3, window_bounds = array<i64: 1, 1, 128, 128>}]} {
    %c0 = arith.constant 0 : index
    %c0_0 = arith.constant 0 : index
    %c0_1 = arith.constant 0 : index
    %c0_2 = arith.constant 0 : index
    %0 = vector.load %arg2[%c0, %c0_0, %c0_1, %c0_2] : memref<1x1x128x128xf32, #tpu.memory_space<vmem>>, vector<1x1x128x128xf32>
    %1 = vector.shape_cast %0 : vector<1x1x128x128xf32> to vector<128x128xf32>
    %c0_3 = arith.constant 0 : index
    %c0_4 = arith.constant 0 : index
    %2 = vector.load %arg3[%c0_3, %c0_4] : memref<1x128xf32, #tpu.memory_space<vmem>>, vector<1x128xf32>
    %3 = vector.broadcast %2 : vector<1x128xf32> to vector<128x128xf32>
    %4 = arith.mulf %1, %3 : vector<128x128xf32>
    %c0_5 = arith.constant 0 : index
    %c0_6 = arith.constant 0 : index
    %5 = vector.load %arg4[%c0_5, %c0_6] : memref<1x128xf32, #tpu.memory_space<vmem>>, vector<1x128xf32>
    %6 = vector.broadcast %5 : vector<1x128xf32> to vector<128x128xf32>
    %7 = arith.addf %4, %6 : vector<128x128xf32>
    %cst = arith.constant 0.000000e+00 : f32
    %8 = vector.broadcast %cst : f32 to vector<128x128xf32>
    %9 = arith.maximumf %7, %8 : vector<128x128xf32>
    %c0_7 = arith.constant 0 : index
    %c0_8 = arith.constant 0 : index
    %c0_9 = arith.constant 0 : index
    %c0_10 = arith.constant 0 : index
    %10 = vector.load %arg5[%c0_7, %c0_8, %c0_9, %c0_10] : memref<1x1x128x128xf32, #tpu.memory_space<vmem>>, vector<1x1x128x128xf32>
    %11 = vector.shape_cast %10 : vector<1x1x128x128xf32> to vector<128x128xf32>
    %12 = vector.shape_cast %9 : vector<128x128xf32> to vector<1x1x128x128xf32>
    tpu.vector_store %arg5[%c0_7, %c0_8, %c0_9, %c0_10], %12 {strides = array<i32>} : memref<1x1x128x128xf32, #tpu.memory_space<vmem>>, vector<1x1x128x128xf32>,
    return
  }
  func.func @transform_0(%arg0: i32, %arg1: i32) -> (i32, i32, i32, i32) {
    %c0_i32 = arith.constant 0 : i32
    %c0_i32_0 = arith.constant 0 : i32
    %c0_i32_1 = arith.constant 0 : i32
    return %arg0, %arg1, %c0_i32, %c0_i32_0 : i32, i32, i32, i32
  }
  func.func @transform_1(%arg0: i32, %arg1: i32) -> (i32, i32) {
    %c0_i32 = arith.constant 0 : i32
    %c0_i32_0 = arith.constant 0 : i32
    %c0_i32_1 = arith.constant 0 : i32
    return %c0_i32, %c0_i32_0 : i32, i32
  }
  func.func @transform_2(%arg0: i32, %arg1: i32) -> (i32, i32) {
    %c0_i32 = arith.constant 0 : i32
    %c0_i32_0 = arith.constant 0 : i32
    %c0_i32_1 = arith.constant 0 : i32
    return %c0_i32, %c0_i32_0 : i32, i32
  }
  func.func @transform_3(%arg0: i32, %arg1: i32) -> (i32, i32, i32, i32) {
    %c0_i32 = arith.constant 0 : i32
    %c0_i32_0 = arith.constant 0 : i32
    %c0_i32_1 = arith.constant 0 : i32
    return %arg0, %arg1, %c0_i32, %c0_i32_0 : i32, i32, i32, i32
  }
}

</mosaic_0001>

<llo_original>
// kernel: signle_conv.3
$region0: #{signle_conv.3}
  #allocation0 [shape = 'u32[]', space=smem, size = 0x4, offset = 0x4, fixed_abs, tag = 'smem constant byte address 0x4 - core index']
  #allocation1 [shape = 'u32[144,128]{1,0:T(1,128)}', space=vmem, size = 0x12000, scoped, tag = 'internal scratch']
  %s0 = inlined_call_operand.vmem [shape: f32[2,2,128,128], index: 0, kind: input, shape index: {}]
  %s1 = inlined_call_operand.vmem [shape: f32[1,128], index: 1, kind: input, shape index: {}]
  %s2 = inlined_call_operand.vmem [shape: f32[1,128], index: 2, kind: input, shape index: {}]
  %s3 = inlined_call_operand.vmem [shape: f32[2,2,128,128], index: 3, kind: output, shape index: {}]
  %s4 = sld [smem:[#allocation0]]
  $region45: #{signle_conv.3} parent=0
    _
  %s6 = ssub.s32 1, %s4
  %s7 = scalar_select 0, %s6, %s4
  loop: start=0, step=1, limit=6
  $region2: #{signle_conv.3} parent=0 // loop_pre_header
    _
  $region3: #{signle_conv.3} parent=0 // loop_header
    %s9 = sphi 0, %s13
    %p10 = scmp.ge.s32.totalorder %s9, 6
    %s16 = sphi 0, %s28
    %s17 = sphi 0, %s24
    %s18 = sphi 0, %s16
    %s19 = sphi 0, %s17
    %s20 = sphi 0, %s18
    %s21 = sphi 0, %s19
    %s33 = sphi 0, %s35
    %s36 = sphi 0, %s33
    %s37 = sphi 0, %s36
    %s53 = sphi 0, %s37
    %s57 = sphi 0, %s57
    %s59 = sphi 0, %s57
    %s60 = sphi 0, %s59
    %s74 = sphi 0, %s60
    %s78 = sphi 0, %s78
    %s80 = sphi 0, %s78
    %s81 = sphi 0, %s80
    %s95 = sphi 0, %s81
    %s103 = sphi 0, %s105
    %s106 = sphi 0, %s103
    %s107 = sphi 0, %s106
    %s123 = sphi 0, %s107
  $region4: #{signle_conv.3} parent=0 // loop_header_branch
    %12 = sbr.rel (%p10) target = $region8
  $region5: #{signle_conv.3} parent=0 // loop_body
    %s14 = ssub.s32 %s9, 1
    %s15 = ssub.s32 %s9, 2
    %s22 = sadd.s32 1, %s17
    %p23 = scmp.ge.s32.totalorder %s22, 2
    %s24 = scalar_select %p23, 0, %s22
    %s25 = sadd.s32 1, %s16
    %s26 = scalar_select %p23, %s25, %s16
    %p27 = scmp.ge.s32.totalorder %s26, 2
    %s28 = scalar_select %p27, 0, %s26
    %s29 = ssub.s32 %s16, %s28
    %s30 = ssub.s32 %s17, %s24
    %s31 = sor.u32 %s29, %s30
    %p32 = scmp.eq.s32.totalorder %s31, 0
    %s34 = sadd.s32 %s33, 1
    %s35 = scalar_select %p32, %s33, %s34
    %p38 = pneg %p32
    %p39 = scmp.eq.s32.totalorder %s9, 3
    %p40 = por %p38, %p39
    %p41 = scmp.ne.s32.totalorder %s33, %s36
    %p42 = scmp.eq.s32.totalorder %s9, 0
    %p43 = por %p41, %p42
    %p44 = scmp.ne.s32.totalorder %s33, %s36
    %p45 = scmp.eq.s32.totalorder %s14, 3
    %p46 = por %p44, %p45
    %p47 = scmp.ne.s32.totalorder %s36, %s37
    %p48 = scmp.eq.s32.totalorder %s14, 0
    %p49 = por %p47, %p48
    %p50 = scmp.ne.s32.totalorder %s36, %s37
    %p51 = scmp.eq.s32.totalorder %s15, 3
    %p52 = por %p50, %p51
    %p54 = scmp.ne.s32.totalorder %s37, %s53
    %p55 = scmp.eq.s32.totalorder %s15, 0
    %p56 = por %p54, %p55
    %s58 = sadd.s32 %s57, 1
    %p61 = scmp.eq.s32.totalorder %s9, 3
    %p62 = scmp.ne.s32.totalorder %s57, %s59
    %p63 = scmp.eq.s32.totalorder %s9, 0
    %p64 = por %p62, %p63
    %p65 = scmp.ne.s32.totalorder %s57, %s59
    %p66 = scmp.eq.s32.totalorder %s14, 3
    %p67 = por %p65, %p66
    %p68 = scmp.ne.s32.totalorder %s59, %s60
    %p69 = scmp.eq.s32.totalorder %s14, 0
    %p70 = por %p68, %p69
    %p71 = scmp.ne.s32.totalorder %s59, %s60
    %p72 = scmp.eq.s32.totalorder %s15, 3
    %p73 = por %p71, %p72
    %p75 = scmp.ne.s32.totalorder %s60, %s74
    %p76 = scmp.eq.s32.totalorder %s15, 0
    %p77 = por %p75, %p76
    %s79 = sadd.s32 %s78, 1
    %p82 = scmp.eq.s32.totalorder %s9, 3
    %p83 = scmp.ne.s32.totalorder %s78, %s80
    %p84 = scmp.eq.s32.totalorder %s9, 0
    %p85 = por %p83, %p84
    %p86 = scmp.ne.s32.totalorder %s78, %s80
    %p87 = scmp.eq.s32.totalorder %s14, 3
    %p88 = por %p86, %p87
    %p89 = scmp.ne.s32.totalorder %s80, %s81
    %p90 = scmp.eq.s32.totalorder %s14, 0
    %p91 = por %p89, %p90
    %p92 = scmp.ne.s32.totalorder %s80, %s81
    %p93 = scmp.eq.s32.totalorder %s15, 3
    %p94 = por %p92, %p93
    %p96 = scmp.ne.s32.totalorder %s81, %s95
    %p97 = scmp.eq.s32.totalorder %s15, 0
    %p98 = por %p96, %p97
    %s99 = ssub.s32 %s16, %s28
    %s100 = ssub.s32 %s17, %s24
    %s101 = sor.u32 %s99, %s100
    %p102 = scmp.eq.s32.totalorder %s101, 0
    %s104 = sadd.s32 %s103, 1
    %s105 = scalar_select %p102, %s103, %s104
    %p108 = pneg %p102
    %p109 = scmp.eq.s32.totalorder %s9, 3
    %p110 = por %p108, %p109
    %p111 = scmp.ne.s32.totalorder %s103, %s106
    %p112 = scmp.eq.s32.totalorder %s9, 0
    %p113 = por %p111, %p112
    %p114 = scmp.ne.s32.totalorder %s103, %s106
    %p115 = scmp.eq.s32.totalorder %s14, 3
    %p116 = por %p114, %p115
    %p117 = scmp.ne.s32.totalorder %s106, %s107
    %p118 = scmp.eq.s32.totalorder %s14, 0
    %p119 = por %p117, %p118
    %p120 = scmp.ne.s32.totalorder %s106, %s107
    %p121 = scmp.eq.s32.totalorder %s15, 3
    %p122 = por %p120, %p121
    %p124 = scmp.ne.s32.totalorder %s107, %s123
    %p125 = scmp.eq.s32.totalorder %s15, 0
    %p126 = por %p124, %p125
    %p127 = scmp.le.s32.totalorder 1, %s9
    %p128 = scmp.lt.s32.totalorder %s9, 5
    %p129 = pnand %p127, %p128
    %p130 = pneg %p129
    // Predicated region
    $region9: #{signle_conv.3} parent=5 // pred_check
      _
    $region10: #{signle_conv.3} parent=5 // pred_check_branch
      %132 = sbr.rel (%p129) target = $region12
    $region11: #{signle_conv.3} parent=5 // pred_region
      %s133 = ssub.s32 %s9, 1
      // Predicated region
      $region13: #{signle_conv.3} parent=11 // pred_check
        %p134 = pneg %p70
      $region14: #{signle_conv.3} parent=11 // pred_check_branch
        %136 = sbr.rel (%p134) target = $region16
      $region15: #{signle_conv.3} parent=11 // pred_region
        _
      $region16: #{signle_conv.3} parent=11 // pred_fallthru
        _
      // Predicated region
      $region17: #{signle_conv.3} parent=11 // pred_check
        %p137 = pneg %p91
      $region18: #{signle_conv.3} parent=11 // pred_check_branch
        %139 = sbr.rel (%p137) target = $region20
      $region19: #{signle_conv.3} parent=11 // pred_region
        _
      $region20: #{signle_conv.3} parent=11 // pred_fallthru
        _
    $region12: #{signle_conv.3} parent=5 // pred_fallthru
      _
    %p140 = scmp.lt.s32.totalorder %s9, 4
    // Predicated region
    $region21: #{signle_conv.3} parent=5 // pred_check
      %p141 = pneg %p140
    $region22: #{signle_conv.3} parent=5 // pred_check_branch
      %143 = sbr.rel (%p141) target = $region24
    $region23: #{signle_conv.3} parent=5 // pred_region
      // Predicated region
      $region25: #{signle_conv.3} parent=23 // pred_check
        %p144 = pneg %p43
      $region26: #{signle_conv.3} parent=23 // pred_check_branch
        %146 = sbr.rel (%p144) target = $region28
      $region27: #{signle_conv.3} parent=23 // pred_region
        %p147 = scmp.lt.s32.totalorder %s16, 1
        %s148 = scalar_select %p147, %s16, 1
        %p149 = scmp.lt.s32.totalorder %s17, 1
        %s150 = scalar_select %p149, %s17, 1
        %s151 = smul.addr %s150, 16
        %s152 = smul.addr %s148, 32
        %s153 = sadd.s32 %s151, %s152
        %s154 = smul.addr %s153, 8
        %s155 = scalar_lea.vmem %s0, %s154
      $region28: #{signle_conv.3} parent=23 // pred_fallthru
        _
    $region24: #{signle_conv.3} parent=5 // pred_fallthru
      _
    %p156 = scmp.le.s32.totalorder 1, %s9
    %p157 = scmp.lt.s32.totalorder %s9, 5
    %p158 = pnand %p156, %p157
    %p159 = pneg %p158
    // Predicated region
    $region29: #{signle_conv.3} parent=5 // pred_check
      _
    $region30: #{signle_conv.3} parent=5 // pred_check_branch
      %161 = sbr.rel (%p158) target = $region32
    $region31: #{signle_conv.3} parent=5 // pred_region
      %s162 = ssub.s32 %s9, 1
      %p163 = scmp.lt.s32.totalorder %s18, 1
      %s164 = scalar_select %p163, %s18, 1
      %p165 = scmp.lt.s32.totalorder %s19, 1
      %s166 = scalar_select %p165, %s19, 1
      %s167 = smul.addr %s166, 16
      %s168 = smul.addr %s164, 32
      %s169 = sadd.s32 %s167, %s168
      %s170 = smul.addr %s169, 8
      %s171 = scalar_lea.vmem %s0, %s170
      %p172 = pneg %p49
      %p173 = pneg %p46
      %p174 = pneg %p70
      %p175 = pneg %p67
      %p176 = pneg %p91
      %p177 = pneg %p88
      %p178 = pneg %p119
      %p179 = pneg %p116
      %p180 = scmp.lt.s32.totalorder %s18, 1
      %s181 = scalar_select %p180, %s18, 1
      %p182 = scmp.lt.s32.totalorder %s19, 1
      %s183 = scalar_select %p182, %s19, 1
      %s184 = smul.addr %s183, 16
      %s185 = smul.addr %s181, 32
      %s186 = sadd.s32 %s184, %s185
      %s187 = smul.addr %s186, 8
      %s188 = scalar_lea.vmem %s3, %s187
      %p189 = scmp.lt.s32.totalorder %s18, 1
      %s190 = scalar_select %p189, %s18, 1
      %p191 = scmp.lt.s32.totalorder %s19, 1
      %s192 = scalar_select %p191, %s19, 1
      %s193 = smul.addr %s192, 16
      %s194 = smul.addr %s190, 32
      %s195 = sadd.s32 %s193, %s194
      %s196 = smul.addr %s195, 8
      %s197 = scalar_lea.vmem %s0, %s196
      %p198 = scmp.lt.s32.totalorder %s18, 1
      %s199 = scalar_select %p198, %s18, 1
      %p200 = scmp.lt.s32.totalorder %s19, 1
      %s201 = scalar_select %p200, %s19, 1
      %s202 = smul.addr %s201, 16
      %s203 = smul.addr %s199, 32
      %s204 = sadd.s32 %s202, %s203
      %s205 = smul.addr %s204, 8
      %s206 = scalar_lea.vmem %s3, %s205
      %v207 = vld [vmem:[%s197] sm:$0xff]
      %v208 = vld [vmem:[%s197 + $0x8] sm:$0xff]
      %v209 = vld [vmem:[%s197 + $0x10] sm:$0xff]
      %v210 = vld [vmem:[%s197 + $0x18] sm:$0xff]
      %v211 = vld [vmem:[%s197 + $0x20] sm:$0xff]
      %v212 = vld [vmem:[%s197 + $0x28] sm:$0xff]
      %v213 = vld [vmem:[%s197 + $0x30] sm:$0xff]
      %v214 = vld [vmem:[%s197 + $0x38] sm:$0xff]
      %v215 = vld [vmem:[%s197 + $0x40] sm:$0xff]
      %v216 = vld [vmem:[%s197 + $0x48] sm:$0xff]
      %v217 = vld [vmem:[%s197 + $0x50] sm:$0xff]
      %v218 = vld [vmem:[%s197 + $0x58] sm:$0xff]
      %v219 = vld [vmem:[%s197 + $0x60] sm:$0xff]
      %v220 = vld [vmem:[%s197 + $0x68] sm:$0xff]
      %v221 = vld [vmem:[%s197 + $0x70] sm:$0xff]
      %v222 = vld [vmem:[%s197 + $0x78] sm:$0xff]
      %v223 = vld [vmem:[%s1] sm:$0x1]
      %v225 = vlaneseq
      %v226 = vshrl.u32 %v225, 7
      %v227 = vsub.s32 0, %v226
      %v228 = vrot.slane %v223, %v227
      %v230 = vmul.f32 %v207, %v228
      %v231 = vmul.f32 %v208, %v228
      %v232 = vmul.f32 %v209, %v228
      %v233 = vmul.f32 %v210, %v228
      %v234 = vmul.f32 %v211, %v228
      %v235 = vmul.f32 %v212, %v228
      %v236 = vmul.f32 %v213, %v228
      %v237 = vmul.f32 %v214, %v228
      %v238 = vmul.f32 %v215, %v228
      %v239 = vmul.f32 %v216, %v228
      %v240 = vmul.f32 %v217, %v228
      %v241 = vmul.f32 %v218, %v228
      %v242 = vmul.f32 %v219, %v228
      %v243 = vmul.f32 %v220, %v228
      %v244 = vmul.f32 %v221, %v228
      %v245 = vmul.f32 %v222, %v228
      %v246 = vld [vmem:[%s2] sm:$0x1]
      %v248 = vlaneseq
      %v249 = vshrl.u32 %v248, 7
      %v250 = vsub.s32 0, %v249
      %v251 = vrot.slane %v246, %v250
      %v253 = vadd.f32 %v230, %v251
      %v254 = vadd.f32 %v231, %v251
      %v255 = vadd.f32 %v232, %v251
      %v256 = vadd.f32 %v233, %v251
      %v257 = vadd.f32 %v234, %v251
      %v258 = vadd.f32 %v235, %v251
      %v259 = vadd.f32 %v236, %v251
      %v260 = vadd.f32 %v237, %v251
      %v261 = vadd.f32 %v238, %v251
      %v262 = vadd.f32 %v239, %v251
      %v263 = vadd.f32 %v240, %v251
      %v264 = vadd.f32 %v241, %v251
      %v265 = vadd.f32 %v242, %v251
      %v266 = vadd.f32 %v243, %v251
      %v267 = vadd.f32 %v244, %v251
      %v268 = vadd.f32 %v245, %v251
      %v269 = vmax.f32 %v253, 0.0
      %v270 = vmax.f32 %v254, 0.0
      %v271 = vmax.f32 %v255, 0.0
      %v272 = vmax.f32 %v256, 0.0
      %v273 = vmax.f32 %v257, 0.0
      %v274 = vmax.f32 %v258, 0.0
      %v275 = vmax.f32 %v259, 0.0
      %v276 = vmax.f32 %v260, 0.0
      %v277 = vmax.f32 %v261, 0.0
      %v278 = vmax.f32 %v262, 0.0
      %v279 = vmax.f32 %v263, 0.0
      %v280 = vmax.f32 %v264, 0.0
      %v281 = vmax.f32 %v265, 0.0
      %v282 = vmax.f32 %v266, 0.0
      %v283 = vmax.f32 %v267, 0.0
      %v284 = vmax.f32 %v268, 0.0
      %285 = vst [vmem:[%s206] sm:$0xff] %v269
      %286 = vst [vmem:[%s206 + $0x8] sm:$0xff] %v270
      %287 = vst [vmem:[%s206 + $0x10] sm:$0xff] %v271
      %288 = vst [vmem:[%s206 + $0x18] sm:$0xff] %v272
      %289 = vst [vmem:[%s206 + $0x20] sm:$0xff] %v273
      %290 = vst [vmem:[%s206 + $0x28] sm:$0xff] %v274
      %291 = vst [vmem:[%s206 + $0x30] sm:$0xff] %v275
      %292 = vst [vmem:[%s206 + $0x38] sm:$0xff] %v276
      %293 = vst [vmem:[%s206 + $0x40] sm:$0xff] %v277
      %294 = vst [vmem:[%s206 + $0x48] sm:$0xff] %v278
      %295 = vst [vmem:[%s206 + $0x50] sm:$0xff] %v279
      %296 = vst [vmem:[%s206 + $0x58] sm:$0xff] %v280
      %297 = vst [vmem:[%s206 + $0x60] sm:$0xff] %v281
      %298 = vst [vmem:[%s206 + $0x68] sm:$0xff] %v282
      %299 = vst [vmem:[%s206 + $0x70] sm:$0xff] %v283
      %300 = vst [vmem:[%s206 + $0x78] sm:$0xff] %v284
      %p301 = scmp.lt.s32.totalorder %s18, 1
      %s302 = scalar_select %p301, %s18, 1
      %p303 = scmp.lt.s32.totalorder %s19, 1
      %s304 = scalar_select %p303, %s19, 1
      %s305 = smul.addr %s304, 16
      %s306 = smul.addr %s302, 32
      %s307 = sadd.s32 %s305, %s306
      %s308 = smul.addr %s307, 8
      %s309 = scalar_lea.vmem %s3, %s308
      // Predicated region
      $region33: #{signle_conv.3} parent=31 // pred_check
        %p310 = pneg %p116
      $region34: #{signle_conv.3} parent=31 // pred_check_branch
        %312 = sbr.rel (%p310) target = $region36
      $region35: #{signle_conv.3} parent=31 // pred_region
        _
      $region36: #{signle_conv.3} parent=31 // pred_fallthru
        _
    $region32: #{signle_conv.3} parent=5 // pred_fallthru
      _
    %p313 = scmp.le.s32.totalorder 2, %s9
    // Predicated region
    $region37: #{signle_conv.3} parent=5 // pred_check
      %p314 = pneg %p313
    $region38: #{signle_conv.3} parent=5 // pred_check_branch
      %316 = sbr.rel (%p314) target = $region40
    $region39: #{signle_conv.3} parent=5 // pred_region
      %s317 = ssub.s32 %s9, 2
      // Predicated region
      $region41: #{signle_conv.3} parent=39 // pred_check
        %p318 = pneg %p122
      $region42: #{signle_conv.3} parent=39 // pred_check_branch
        %320 = sbr.rel (%p318) target = $region44
      $region43: #{signle_conv.3} parent=39 // pred_region
        %p321 = scmp.lt.s32.totalorder %s20, 1
        %s322 = scalar_select %p321, %s20, 1
        %p323 = scmp.lt.s32.totalorder %s21, 1
        %s324 = scalar_select %p323, %s21, 1
        %s325 = smul.addr %s324, 16
        %s326 = smul.addr %s322, 32
        %s327 = sadd.s32 %s325, %s326
        %s328 = smul.addr %s327, 8
        %s329 = scalar_lea.vmem %s3, %s328
      $region44: #{signle_conv.3} parent=39 // pred_fallthru
        _
    $region40: #{signle_conv.3} parent=5 // pred_fallthru
      _
  $region6: #{signle_conv.3} parent=0 // loop_footer
    %s13 = sadd.s32 1, %s9
  $region7: #{signle_conv.3} parent=0 // loop_footer_branch
    %8 = sbr.rel target = $region3
  $region8: #{signle_conv.3} parent=0 // loop_exit
    _

// kernel: signle_conv.2
$region0: #{signle_conv.2}
  #allocation0 [shape = 'u32[]', space=smem, size = 0x4, offset = 0x4, fixed_abs, tag = 'smem constant byte address 0x4 - core index']
  #allocation1 [shape = 'u32[144,128]{1,0:T(1,128)}', space=vmem, size = 0x12000, scoped, tag = 'internal scratch']
  %s0 = inlined_call_operand.vmem [shape: bf16[2,2,10,18,4], index: 0, kind: input, shape index: {}]
  %s1 = inlined_call_operand.vmem [shape: bf16[36,128], index: 1, kind: input, shape index: {}]
  %s2 = inlined_call_operand.vmem [shape: f32[2,2,128,128], index: 2, kind: output, shape index: {0}]
  %s3 = inlined_call_operand.vmem [shape: f32[2,2,2,128], index: 3, kind: output, shape index: {1}]
  %4 = xla_tuple %s2, %s3
  %s5 = sld [smem:[#allocation0]]
  $region49: #{signle_conv.2} parent=0
    _
  %s7 = ssub.s32 1, %s5
  %s8 = scalar_select 0, %s7, %s5
  loop: start=0, step=1, limit=6
  $region2: #{signle_conv.2} parent=0 // loop_pre_header
    _
  $region3: #{signle_conv.2} parent=0 // loop_header
    %s10 = sphi 0, %s14
    %p11 = scmp.ge.s32.totalorder %s10, 6
    %s17 = sphi 0, %s29
    %s18 = sphi 0, %s25
    %s19 = sphi 0, %s17
    %s20 = sphi 0, %s18
    %s21 = sphi 0, %s19
    %s22 = sphi 0, %s20
    %s34 = sphi 0, %s36
    %s37 = sphi 0, %s34
    %s38 = sphi 0, %s37
    %s54 = sphi 0, %s38
    %s58 = sphi 0, %s58
    %s60 = sphi 0, %s58
    %s61 = sphi 0, %s60
    %s75 = sphi 0, %s61
    %s83 = sphi 0, %s85
    %s86 = sphi 0, %s83
    %s87 = sphi 0, %s86
    %s103 = sphi 0, %s87
    %s111 = sphi 0, %s113
    %s114 = sphi 0, %s111
    %s115 = sphi 0, %s114
    %s131 = sphi 0, %s115
  $region4: #{signle_conv.2} parent=0 // loop_header_branch
    %13 = sbr.rel (%p11) target = $region8
  $region5: #{signle_conv.2} parent=0 // loop_body
    %s15 = ssub.s32 %s10, 1
    %s16 = ssub.s32 %s10, 2
    %s23 = sadd.s32 1, %s18
    %p24 = scmp.ge.s32.totalorder %s23, 2
    %s25 = scalar_select %p24, 0, %s23
    %s26 = sadd.s32 1, %s17
    %s27 = scalar_select %p24, %s26, %s17
    %p28 = scmp.ge.s32.totalorder %s27, 2
    %s29 = scalar_select %p28, 0, %s27
    %s30 = ssub.s32 %s17, %s29
    %s31 = ssub.s32 %s18, %s25
    %s32 = sor.u32 %s30, %s31
    %p33 = scmp.eq.s32.totalorder %s32, 0
    %s35 = sadd.s32 %s34, 1
    %s36 = scalar_select %p33, %s34, %s35
    %p39 = pneg %p33
    %p40 = scmp.eq.s32.totalorder %s10, 3
    %p41 = por %p39, %p40
    %p42 = scmp.ne.s32.totalorder %s34, %s37
    %p43 = scmp.eq.s32.totalorder %s10, 0
    %p44 = por %p42, %p43
    %p45 = scmp.ne.s32.totalorder %s34, %s37
    %p46 = scmp.eq.s32.totalorder %s15, 3
    %p47 = por %p45, %p46
    %p48 = scmp.ne.s32.totalorder %s37, %s38
    %p49 = scmp.eq.s32.totalorder %s15, 0
    %p50 = por %p48, %p49
    %p51 = scmp.ne.s32.totalorder %s37, %s38
    %p52 = scmp.eq.s32.totalorder %s16, 3
    %p53 = por %p51, %p52
    %p55 = scmp.ne.s32.totalorder %s38, %s54
    %p56 = scmp.eq.s32.totalorder %s16, 0
    %p57 = por %p55, %p56
    %s59 = sadd.s32 %s58, 1
    %p62 = scmp.eq.s32.totalorder %s10, 3
    %p63 = scmp.ne.s32.totalorder %s58, %s60
    %p64 = scmp.eq.s32.totalorder %s10, 0
    %p65 = por %p63, %p64
    %p66 = scmp.ne.s32.totalorder %s58, %s60
    %p67 = scmp.eq.s32.totalorder %s15, 3
    %p68 = por %p66, %p67
    %p69 = scmp.ne.s32.totalorder %s60, %s61
    %p70 = scmp.eq.s32.totalorder %s15, 0
    %p71 = por %p69, %p70
    %p72 = scmp.ne.s32.totalorder %s60, %s61
    %p73 = scmp.eq.s32.totalorder %s16, 3
    %p74 = por %p72, %p73
    %p76 = scmp.ne.s32.totalorder %s61, %s75
    %p77 = scmp.eq.s32.totalorder %s16, 0
    %p78 = por %p76, %p77
    %s79 = ssub.s32 %s17, %s29
    %s80 = ssub.s32 %s18, %s25
    %s81 = sor.u32 %s79, %s80
    %p82 = scmp.eq.s32.totalorder %s81, 0
    %s84 = sadd.s32 %s83, 1
    %s85 = scalar_select %p82, %s83, %s84
    %p88 = pneg %p82
    %p89 = scmp.eq.s32.totalorder %s10, 3
    %p90 = por %p88, %p89
    %p91 = scmp.ne.s32.totalorder %s83, %s86
    %p92 = scmp.eq.s32.totalorder %s10, 0
    %p93 = por %p91, %p92
    %p94 = scmp.ne.s32.totalorder %s83, %s86
    %p95 = scmp.eq.s32.totalorder %s15, 3
    %p96 = por %p94, %p95
    %p97 = scmp.ne.s32.totalorder %s86, %s87
    %p98 = scmp.eq.s32.totalorder %s15, 0
    %p99 = por %p97, %p98
    %p100 = scmp.ne.s32.totalorder %s86, %s87
    %p101 = scmp.eq.s32.totalorder %s16, 3
    %p102 = por %p100, %p101
    %p104 = scmp.ne.s32.totalorder %s87, %s103
    %p105 = scmp.eq.s32.totalorder %s16, 0
    %p106 = por %p104, %p105
    %s107 = ssub.s32 %s17, %s29
    %s108 = ssub.s32 %s18, %s25
    %s109 = sor.u32 %s107, %s108
    %p110 = scmp.eq.s32.totalorder %s109, 0
    %s112 = sadd.s32 %s111, 1
    %s113 = scalar_select %p110, %s111, %s112
    %p116 = pneg %p110
    %p117 = scmp.eq.s32.totalorder %s10, 3
    %p118 = por %p116, %p117
    %p119 = scmp.ne.s32.totalorder %s111, %s114
    %p120 = scmp.eq.s32.totalorder %s10, 0
    %p121 = por %p119, %p120
    %p122 = scmp.ne.s32.totalorder %s111, %s114
    %p123 = scmp.eq.s32.totalorder %s15, 3
    %p124 = por %p122, %p123
    %p125 = scmp.ne.s32.totalorder %s114, %s115
    %p126 = scmp.eq.s32.totalorder %s15, 0
    %p127 = por %p125, %p126
    %p128 = scmp.ne.s32.totalorder %s114, %s115
    %p129 = scmp.eq.s32.totalorder %s16, 3
    %p130 = por %p128, %p129
    %p132 = scmp.ne.s32.totalorder %s115, %s131
    %p133 = scmp.eq.s32.totalorder %s16, 0
    %p134 = por %p132, %p133
    %p135 = scmp.le.s32.totalorder 1, %s10
    %p136 = scmp.lt.s32.totalorder %s10, 5
    %p137 = pnand %p135, %p136
    %p138 = pneg %p137
    // Predicated region
    $region9: #{signle_conv.2} parent=5 // pred_check
      _
    $region10: #{signle_conv.2} parent=5 // pred_check_branch
      %140 = sbr.rel (%p137) target = $region12
    $region11: #{signle_conv.2} parent=5 // pred_region
      %s141 = ssub.s32 %s10, 1
      // Predicated region
      $region13: #{signle_conv.2} parent=11 // pred_check
        %p142 = pneg %p71
      $region14: #{signle_conv.2} parent=11 // pred_check_branch
        %144 = sbr.rel (%p142) target = $region16
      $region15: #{signle_conv.2} parent=11 // pred_region
        _
      $region16: #{signle_conv.2} parent=11 // pred_fallthru
        _
    $region12: #{signle_conv.2} parent=5 // pred_fallthru
      _
    %p145 = scmp.lt.s32.totalorder %s10, 4
    // Predicated region
    $region17: #{signle_conv.2} parent=5 // pred_check
      %p146 = pneg %p145
    $region18: #{signle_conv.2} parent=5 // pred_check_branch
      %148 = sbr.rel (%p146) target = $region20
    $region19: #{signle_conv.2} parent=5 // pred_region
      // Predicated region
      $region21: #{signle_conv.2} parent=19 // pred_check
        %p149 = pneg %p44
      $region22: #{signle_conv.2} parent=19 // pred_check_branch
        %151 = sbr.rel (%p149) target = $region24
      $region23: #{signle_conv.2} parent=19 // pred_region
        %p152 = scmp.lt.s32.totalorder %s17, 1
        %s153 = scalar_select %p152, %s17, 1
        %p154 = scmp.lt.s32.totalorder %s18, 1
        %s155 = scalar_select %p154, %s18, 1
        %s156 = smul.addr %s155, 30
        %s157 = smul.addr %s153, 60
        %s158 = sadd.s32 %s156, %s157
        %s159 = smul.addr %s158, 4
        %s160 = scalar_lea.vmem %s0, %s159
      $region24: #{signle_conv.2} parent=19 // pred_fallthru
        _
    $region20: #{signle_conv.2} parent=5 // pred_fallthru
      _
    %p161 = scmp.le.s32.totalorder 1, %s10
    %p162 = scmp.lt.s32.totalorder %s10, 5
    %p163 = pnand %p161, %p162
    %p164 = pneg %p163
    // Predicated region
    $region25: #{signle_conv.2} parent=5 // pred_check
      _
    $region26: #{signle_conv.2} parent=5 // pred_check_branch
      %166 = sbr.rel (%p163) target = $region28
    $region27: #{signle_conv.2} parent=5 // pred_region
      %s167 = ssub.s32 %s10, 1
      %p168 = scmp.lt.s32.totalorder %s19, 1
      %s169 = scalar_select %p168, %s19, 1
      %p170 = scmp.lt.s32.totalorder %s20, 1
      %s171 = scalar_select %p170, %s20, 1
      %s172 = smul.addr %s171, 30
      %s173 = smul.addr %s169, 60
      %s174 = sadd.s32 %s172, %s173
      %s175 = smul.addr %s174, 4
      %s176 = scalar_lea.vmem %s0, %s175
      %p177 = pneg %p50
      %p178 = pneg %p47
      %p179 = pneg %p71
      %p180 = pneg %p68
      %p181 = pneg %p99
      %p182 = pneg %p96
      %p183 = scmp.lt.s32.totalorder %s19, 1
      %s184 = scalar_select %p183, %s19, 1
      %p185 = scmp.lt.s32.totalorder %s20, 1
      %s186 = scalar_select %p185, %s20, 1
      %s187 = smul.addr %s186, 16
      %s188 = smul.addr %s184, 32
      %s189 = sadd.s32 %s187, %s188
      %s190 = smul.addr %s189, 8
      %s191 = scalar_lea.vmem %s2, %s190
      %p192 = pneg %p127
      %p193 = pneg %p124
      %p194 = scmp.lt.s32.totalorder %s19, 1
      %s195 = scalar_select %p194, %s19, 1
      %p196 = scmp.lt.s32.totalorder %s20, 1
      %s197 = scalar_select %p196, %s20, 1
      %s198 = smul.addr %s195, 2
      %s199 = sadd.s32 %s197, %s198
      %s200 = smul.addr %s199, 2
      %s201 = scalar_lea.vmem %s3, %s200
      %p202 = scmp.lt.s32.totalorder %s19, 1
      %s203 = scalar_select %p202, %s19, 1
      %p204 = scmp.lt.s32.totalorder %s20, 1
      %s205 = scalar_select %p204, %s20, 1
      %s206 = smul.addr %s205, 30
      %s207 = smul.addr %s203, 60
      %s208 = sadd.s32 %s206, %s207
      %s209 = smul.addr %s208, 4
      %s210 = scalar_lea.vmem %s0, %s209
      %p211 = scmp.lt.s32.totalorder %s19, 1
      %s212 = scalar_select %p211, %s19, 1
      %p213 = scmp.lt.s32.totalorder %s20, 1
      %s214 = scalar_select %p213, %s20, 1
      %s215 = smul.addr %s214, 16
      %s216 = smul.addr %s212, 32
      %s217 = sadd.s32 %s215, %s216
      %s218 = smul.addr %s217, 8
      %s219 = scalar_lea.vmem %s2, %s218
      %p220 = scmp.lt.s32.totalorder %s19, 1
      %s221 = scalar_select %p220, %s19, 1
      %p222 = scmp.lt.s32.totalorder %s20, 1
      %s223 = scalar_select %p222, %s20, 1
      %s224 = smul.addr %s221, 2
      %s225 = sadd.s32 %s223, %s224
      %s226 = smul.addr %s225, 2
      %s227 = scalar_lea.vmem %s3, %s226
      %v229 = vld [vmem:[%s210] sm:$0xf]
      %v230 = vld [vmem:[%s210 + $0x4] sm:$0xf]
      %v231 = vld [vmem:[%s210 + $0xc] sm:$0xf]
      %v232 = vld [vmem:[%s210 + $0x10] sm:$0xf]
      %v233 = vld [vmem:[%s210 + $0x18] sm:$0xf]
      %v234 = vld [vmem:[%s210 + $0x1c] sm:$0xf]
      %v235 = vld [vmem:[%s210 + $0x24] sm:$0xf]
      %v236 = vld [vmem:[%s210 + $0x28] sm:$0xf]
      %v237 = vld [vmem:[%s210 + $0x30] sm:$0xf]
      %v238 = vld [vmem:[%s210 + $0x34] sm:$0xf]
      %v239 = vld [vmem:[%s210 + $0x3c] sm:$0xf]
      %v240 = vld [vmem:[%s210 + $0x40] sm:$0xf]
      %v241 = vld [vmem:[%s210 + $0x48] sm:$0xf]
      %v242 = vld [vmem:[%s210 + $0x4c] sm:$0xf]
      %v243 = vld [vmem:[%s210 + $0x54] sm:$0xf]
      %v244 = vld [vmem:[%s210 + $0x58] sm:$0xf]
      %v245 = vld [vmem:[%s210 + $0x8] sm:$0x1]
      %v246 = vld [vmem:[%s210 + $0x14] sm:$0x1]
      %v247 = vld [vmem:[%s210 + $0x20] sm:$0x1]
      %v248 = vld [vmem:[%s210 + $0x2c] sm:$0x1]
      %v249 = vld [vmem:[%s210 + $0x38] sm:$0x1]
      %v250 = vld [vmem:[%s210 + $0x44] sm:$0x1]
      %v251 = vld [vmem:[%s210 + $0x50] sm:$0x1]
      %v252 = vld [vmem:[%s210 + $0x5c] sm:$0x1]
      %vm253 = vsmask.f32 3328
      %vm254 = vsmask.f32 7440
      %vm255 = vmor %vm253, %vm254
      %v257 = vshrl.u32 %v229, 16
      %v259 = vrot.slane %v257, 4
      %v260 = vshll.u32 %v229, 16
      %v262 = vrot.slane %v260, 5
      %v263 = vor.u32 %v259, %v262
      %v264 = vrot.slane %v263, 4
      %v266 = vshll.u32 %v230, 16
      %v268 = vrot.slane %v266, 5
      %v269 = vsel %vm255, %v264, %v268
      %v270 = vshrl.u32 %v230, 16
      %v272 = vrot.slane %v270, 4
      %v273 = vor.u32 %v272, %v268
      %v274 = vrot.slane %v273, 4
      %v276 = vshll.u32 %v245, 16
      %v278 = vrot.slane %v276, 5
      %v279 = vsel %vm255, %v274, %v278
      %v281 = vshrl.u32 %v231, 16
      %v283 = vrot.slane %v281, 4
      %v284 = vshll.u32 %v231, 16
      %v286 = vrot.slane %v284, 5
      %v287 = vor.u32 %v283, %v286
      %v288 = vrot.slane %v287, 4
      %v290 = vshll.u32 %v232, 16
      %v292 = vrot.slane %v290, 5
      %v293 = vsel %vm255, %v288, %v292
      %v294 = vshrl.u32 %v232, 16
      %v296 = vrot.slane %v294, 4
      %v297 = vor.u32 %v296, %v292
      %v298 = vrot.slane %v297, 4
      %v300 = vshll.u32 %v246, 16
      %v302 = vrot.slane %v300, 5
      %v303 = vsel %vm255, %v298, %v302
      %v305 = vshrl.u32 %v233, 16
      %v307 = vrot.slane %v305, 4
      %v308 = vshll.u32 %v233, 16
      %v310 = vrot.slane %v308, 5
      %v311 = vor.u32 %v307, %v310
      %v312 = vrot.slane %v311, 4
      %v314 = vshll.u32 %v234, 16
      %v316 = vrot.slane %v314, 5
      %v317 = vsel %vm255, %v312, %v316
      %v318 = vshrl.u32 %v234, 16
      %v320 = vrot.slane %v318, 4
      %v321 = vor.u32 %v320, %v316
      %v322 = vrot.slane %v321, 4
      %v324 = vshll.u32 %v247, 16
      %v326 = vrot.slane %v324, 5
      %v327 = vsel %vm255, %v322, %v326
      %v329 = vshrl.u32 %v235, 16
      %v331 = vrot.slane %v329, 4
      %v332 = vshll.u32 %v235, 16
      %v334 = vrot.slane %v332, 5
      %v335 = vor.u32 %v331, %v334
      %v336 = vrot.slane %v335, 4
      %v338 = vshll.u32 %v236, 16
      %v340 = vrot.slane %v338, 5
      %v341 = vsel %vm255, %v336, %v340
      %v342 = vshrl.u32 %v236, 16
      %v344 = vrot.slane %v342, 4
      %v345 = vor.u32 %v344, %v340
      %v346 = vrot.slane %v345, 4
      %v348 = vshll.u32 %v248, 16
      %v350 = vrot.slane %v348, 5
      %v351 = vsel %vm255, %v346, %v350
      %v353 = vshrl.u32 %v237, 16
      %v355 = vrot.slane %v353, 4
      %v356 = vshll.u32 %v237, 16
      %v358 = vrot.slane %v356, 5
      %v359 = vor.u32 %v355, %v358
      %v360 = vrot.slane %v359, 4
      %v362 = vshll.u32 %v238, 16
      %v364 = vrot.slane %v362, 5
      %v365 = vsel %vm255, %v360, %v364
      %v366 = vshrl.u32 %v238, 16
      %v368 = vrot.slane %v366, 4
      %v369 = vor.u32 %v368, %v364
      %v370 = vrot.slane %v369, 4
      %v372 = vshll.u32 %v249, 16
      %v374 = vrot.slane %v372, 5
      %v375 = vsel %vm255, %v370, %v374
      %v377 = vshrl.u32 %v239, 16
      %v379 = vrot.slane %v377, 4
      %v380 = vshll.u32 %v239, 16
      %v382 = vrot.slane %v380, 5
      %v383 = vor.u32 %v379, %v382
      %v384 = vrot.slane %v383, 4
      %v386 = vshll.u32 %v240, 16
      %v388 = vrot.slane %v386, 5
      %v389 = vsel %vm255, %v384, %v388
      %v390 = vshrl.u32 %v240, 16
      %v392 = vrot.slane %v390, 4
      %v393 = vor.u32 %v392, %v388
      %v394 = vrot.slane %v393, 4
      %v396 = vshll.u32 %v250, 16
      %v398 = vrot.slane %v396, 5
      %v399 = vsel %vm255, %v394, %v398
      %v401 = vshrl.u32 %v241, 16
      %v403 = vrot.slane %v401, 4
      %v404 = vshll.u32 %v241, 16
      %v406 = vrot.slane %v404, 5
      %v407 = vor.u32 %v403, %v406
      %v408 = vrot.slane %v407, 4
      %v410 = vshll.u32 %v242, 16
      %v412 = vrot.slane %v410, 5
      %v413 = vsel %vm255, %v408, %v412
      %v414 = vshrl.u32 %v242, 16
      %v416 = vrot.slane %v414, 4
      %v417 = vor.u32 %v416, %v412
      %v418 = vrot.slane %v417, 4
      %v420 = vshll.u32 %v251, 16
      %v422 = vrot.slane %v420, 5
      %v423 = vsel %vm255, %v418, %v422
      %v425 = vshrl.u32 %v243, 16
      %v427 = vrot.slane %v425, 4
      %v428 = vshll.u32 %v243, 16
      %v430 = vrot.slane %v428, 5
      %v431 = vor.u32 %v427, %v430
      %v432 = vrot.slane %v431, 4
      %v434 = vshll.u32 %v244, 16
      %v436 = vrot.slane %v434, 5
      %v437 = vsel %vm255, %v432, %v436
      %v438 = vshrl.u32 %v244, 16
      %v440 = vrot.slane %v438, 4
      %v441 = vor.u32 %v440, %v436
      %v442 = vrot.slane %v441, 4
      %v444 = vshll.u32 %v252, 16
      %v446 = vrot.slane %v444, 5
      %v447 = vsel %vm255, %v442, %v446
      %v448 = vld [vmem:[%s210] sm:$0xe]
      %v449 = vld [vmem:[%s210 + $0xc] sm:$0xe]
      %v450 = vld [vmem:[%s210 + $0x18] sm:$0xe]
      %v451 = vld [vmem:[%s210 + $0x24] sm:$0xe]
      %v452 = vld [vmem:[%s210 + $0x30] sm:$0xe]
      %v453 = vld [vmem:[%s210 + $0x3c] sm:$0xe]
      %v454 = vld [vmem:[%s210 + $0x48] sm:$0xe]
      %v455 = vld [vmem:[%s210 + $0x54] sm:$0xe]
      %vm480 = vcmask 1042432
      %vm481 = vcmask 1046532
      %vm482 = vmor %vm480, %vm481
      %v483 = vrot.slane %v448, 5
      %v484 = vrot.slane %v483, 4
      %v485 = vrot.slane %v230, 5
      %v486 = vsel %vm482, %v484, %v485
      %v487 = vrot.slane %v485, 4
      %v488 = vrot.slane %v245, 5
      %v489 = vsel %vm482, %v487, %v488
      %v490 = vrot.slane %v449, 5
      %v491 = vrot.slane %v490, 4
      %v492 = vrot.slane %v232, 5
      %v493 = vsel %vm482, %v491, %v492
      %v494 = vrot.slane %v492, 4
      %v495 = vrot.slane %v246, 5
      %v496 = vsel %vm482, %v494, %v495
      %v497 = vrot.slane %v450, 5
      %v498 = vrot.slane %v497, 4
      %v499 = vrot.slane %v234, 5
      %v500 = vsel %vm482, %v498, %v499
      %v501 = vrot.slane %v499, 4
      %v502 = vrot.slane %v247, 5
      %v503 = vsel %vm482, %v501, %v502
      %v504 = vrot.slane %v451, 5
      %v505 = vrot.slane %v504, 4
      %v506 = vrot.slane %v236, 5
      %v507 = vsel %vm482, %v505, %v506
      %v508 = vrot.slane %v506, 4
      %v509 = vrot.slane %v248, 5
      %v510 = vsel %vm482, %v508, %v509
      %v511 = vrot.slane %v452, 5
      %v512 = vrot.slane %v511, 4
      %v513 = vrot.slane %v238, 5
      %v514 = vsel %vm482, %v512, %v513
      %v515 = vrot.slane %v513, 4
      %v516 = vrot.slane %v249, 5
      %v517 = vsel %vm482, %v515, %v516
      %v518 = vrot.slane %v453, 5
      %v519 = vrot.slane %v518, 4
      %v520 = vrot.slane %v240, 5
      %v521 = vsel %vm482, %v519, %v520
      %v522 = vrot.slane %v520, 4
      %v523 = vrot.slane %v250, 5
      %v524 = vsel %vm482, %v522, %v523
      %v525 = vrot.slane %v454, 5
      %v526 = vrot.slane %v525, 4
      %v527 = vrot.slane %v242, 5
      %v528 = vsel %vm482, %v526, %v527
      %v529 = vrot.slane %v527, 4
      %v530 = vrot.slane %v251, 5
      %v531 = vsel %vm482, %v529, %v530
      %v532 = vrot.slane %v455, 5
      %v533 = vrot.slane %v532, 4
      %v534 = vrot.slane %v244, 5
      %v535 = vsel %vm482, %v533, %v534
      %v536 = vrot.slane %v534, 4
      %v537 = vrot.slane %v252, 5
      %v538 = vsel %vm482, %v536, %v537
      %s539 = scalar_lea.vmem %s210, 12
      %v540 = vld [vmem:[%s539] sm:$0xf]
      %v541 = vld [vmem:[%s539 + $0x4] sm:$0xf]
      %v542 = vld [vmem:[%s539 + $0xc] sm:$0xf]
      %v543 = vld [vmem:[%s539 + $0x10] sm:$0xf]
      %v544 = vld [vmem:[%s539 + $0x18] sm:$0xf]
      %v545 = vld [vmem:[%s539 + $0x1c] sm:$0xf]
      %v546 = vld [vmem:[%s539 + $0x24] sm:$0xf]
      %v547 = vld [vmem:[%s539 + $0x28] sm:$0xf]
      %v548 = vld [vmem:[%s539 + $0x30] sm:$0xf]
      %v549 = vld [vmem:[%s539 + $0x34] sm:$0xf]
      %v550 = vld [vmem:[%s539 + $0x3c] sm:$0xf]
      %v551 = vld [vmem:[%s539 + $0x40] sm:$0xf]
      %v552 = vld [vmem:[%s539 + $0x48] sm:$0xf]
      %v553 = vld [vmem:[%s539 + $0x4c] sm:$0xf]
      %v554 = vld [vmem:[%s539 + $0x54] sm:$0xf]
      %v555 = vld [vmem:[%s539 + $0x58] sm:$0xf]
      %v556 = vld [vmem:[%s539 + $0x8] sm:$0x1]
      %v557 = vld [vmem:[%s539 + $0x14] sm:$0x1]
      %v558 = vld [vmem:[%s539 + $0x20] sm:$0x1]
      %v559 = vld [vmem:[%s539 + $0x2c] sm:$0x1]
      %v560 = vld [vmem:[%s539 + $0x38] sm:$0x1]
      %v561 = vld [vmem:[%s539 + $0x44] sm:$0x1]
      %v562 = vld [vmem:[%s539 + $0x50] sm:$0x1]
      %v563 = vld [vmem:[%s539 + $0x5c] sm:$0x1]
      %v565 = vshrl.u32 %v540, 16
      %v567 = vrot.slane %v565, 4
      %v568 = vshll.u32 %v540, 16
      %v570 = vrot.slane %v568, 5
      %v571 = vor.u32 %v567, %v570
      %v572 = vrot.slane %v571, 4
      %v574 = vshll.u32 %v541, 16
      %v576 = vrot.slane %v574, 5
      %v577 = vsel %vm255, %v572, %v576
      %v578 = vshrl.u32 %v541, 16
      %v580 = vrot.slane %v578, 4
      %v581 = vor.u32 %v580, %v576
      %v582 = vrot.slane %v581, 4
      %v584 = vshll.u32 %v556, 16
      %v586 = vrot.slane %v584, 5
      %v587 = vsel %vm255, %v582, %v586
      %v589 = vshrl.u32 %v542, 16
      %v591 = vrot.slane %v589, 4
      %v592 = vshll.u32 %v542, 16
      %v594 = vrot.slane %v592, 5
      %v595 = vor.u32 %v591, %v594
      %v596 = vrot.slane %v595, 4
      %v598 = vshll.u32 %v543, 16
      %v600 = vrot.slane %v598, 5
      %v601 = vsel %vm255, %v596, %v600
      %v602 = vshrl.u32 %v543, 16
      %v604 = vrot.slane %v602, 4
      %v605 = vor.u32 %v604, %v600
      %v606 = vrot.slane %v605, 4
      %v608 = vshll.u32 %v557, 16
      %v610 = vrot.slane %v608, 5
      %v611 = vsel %vm255, %v606, %v610
      %v613 = vshrl.u32 %v544, 16
      %v615 = vrot.slane %v613, 4
      %v616 = vshll.u32 %v544, 16
      %v618 = vrot.slane %v616, 5
      %v619 = vor.u32 %v615, %v618
      %v620 = vrot.slane %v619, 4
      %v622 = vshll.u32 %v545, 16
      %v624 = vrot.slane %v622, 5
      %v625 = vsel %vm255, %v620, %v624
      %v626 = vshrl.u32 %v545, 16
      %v628 = vrot.slane %v626, 4
      %v629 = vor.u32 %v628, %v624
      %v630 = vrot.slane %v629, 4
      %v632 = vshll.u32 %v558, 16
      %v634 = vrot.slane %v632, 5
      %v635 = vsel %vm255, %v630, %v634
      %v637 = vshrl.u32 %v546, 16
      %v639 = vrot.slane %v637, 4
      %v640 = vshll.u32 %v546, 16
      %v642 = vrot.slane %v640, 5
      %v643 = vor.u32 %v639, %v642
      %v644 = vrot.slane %v643, 4
      %v646 = vshll.u32 %v547, 16
      %v648 = vrot.slane %v646, 5
      %v649 = vsel %vm255, %v644, %v648
      %v650 = vshrl.u32 %v547, 16
      %v652 = vrot.slane %v650, 4
      %v653 = vor.u32 %v652, %v648
      %v654 = vrot.slane %v653, 4
      %v656 = vshll.u32 %v559, 16
      %v658 = vrot.slane %v656, 5
      %v659 = vsel %vm255, %v654, %v658
      %v661 = vshrl.u32 %v548, 16
      %v663 = vrot.slane %v661, 4
      %v664 = vshll.u32 %v548, 16
      %v666 = vrot.slane %v664, 5
      %v667 = vor.u32 %v663, %v666
      %v668 = vrot.slane %v667, 4
      %v670 = vshll.u32 %v549, 16
      %v672 = vrot.slane %v670, 5
      %v673 = vsel %vm255, %v668, %v672
      %v674 = vshrl.u32 %v549, 16
      %v676 = vrot.slane %v674, 4
      %v677 = vor.u32 %v676, %v672
      %v678 = vrot.slane %v677, 4
      %v680 = vshll.u32 %v560, 16
      %v682 = vrot.slane %v680, 5
      %v683 = vsel %vm255, %v678, %v682
      %v685 = vshrl.u32 %v550, 16
      %v687 = vrot.slane %v685, 4
      %v688 = vshll.u32 %v550, 16
      %v690 = vrot.slane %v688, 5
      %v691 = vor.u32 %v687, %v690
      %v692 = vrot.slane %v691, 4
      %v694 = vshll.u32 %v551, 16
      %v696 = vrot.slane %v694, 5
      %v697 = vsel %vm255, %v692, %v696
      %v698 = vshrl.u32 %v551, 16
      %v700 = vrot.slane %v698, 4
      %v701 = vor.u32 %v700, %v696
      %v702 = vrot.slane %v701, 4
      %v704 = vshll.u32 %v561, 16
      %v706 = vrot.slane %v704, 5
      %v707 = vsel %vm255, %v702, %v706
      %v709 = vshrl.u32 %v552, 16
      %v711 = vrot.slane %v709, 4
      %v712 = vshll.u32 %v552, 16
      %v714 = vrot.slane %v712, 5
      %v715 = vor.u32 %v711, %v714
      %v716 = vrot.slane %v715, 4
      %v718 = vshll.u32 %v553, 16
      %v720 = vrot.slane %v718, 5
      %v721 = vsel %vm255, %v716, %v720
      %v722 = vshrl.u32 %v553, 16
      %v724 = vrot.slane %v722, 4
      %v725 = vor.u32 %v724, %v720
      %v726 = vrot.slane %v725, 4
      %v728 = vshll.u32 %v562, 16
      %v730 = vrot.slane %v728, 5
      %v731 = vsel %vm255, %v726, %v730
      %v733 = vshrl.u32 %v554, 16
      %v735 = vrot.slane %v733, 4
      %v736 = vshll.u32 %v554, 16
      %v738 = vrot.slane %v736, 5
      %v739 = vor.u32 %v735, %v738
      %v740 = vrot.slane %v739, 4
      %v742 = vshll.u32 %v555, 16
      %v744 = vrot.slane %v742, 5
      %v745 = vsel %vm255, %v740, %v744
      %v746 = vshrl.u32 %v555, 16
      %v748 = vrot.slane %v746, 4
      %v749 = vor.u32 %v748, %v744
      %v750 = vrot.slane %v749, 4
      %v752 = vshll.u32 %v563, 16
      %v754 = vrot.slane %v752, 5
      %v755 = vsel %vm255, %v750, %v754
      %v756 = vld [vmem:[%s539] sm:$0xe]
      %v757 = vld [vmem:[%s539 + $0xc] sm:$0xe]
      %v758 = vld [vmem:[%s539 + $0x18] sm:$0xe]
      %v759 = vld [vmem:[%s539 + $0x24] sm:$0xe]
      %v760 = vld [vmem:[%s539 + $0x30] sm:$0xe]
      %v761 = vld [vmem:[%s539 + $0x3c] sm:$0xe]
      %v762 = vld [vmem:[%s539 + $0x48] sm:$0xe]
      %v763 = vld [vmem:[%s539 + $0x54] sm:$0xe]
      %v788 = vrot.slane %v756, 5
      %v789 = vrot.slane %v788, 4
      %v790 = vrot.slane %v541, 5
      %v791 = vsel %vm482, %v789, %v790
      %v792 = vrot.slane %v790, 4
      %v793 = vrot.slane %v556, 5
      %v794 = vsel %vm482, %v792, %v793
      %v795 = vrot.slane %v757, 5
      %v796 = vrot.slane %v795, 4
      %v797 = vrot.slane %v543, 5
      %v798 = vsel %vm482, %v796, %v797
      %v799 = vrot.slane %v797, 4
      %v800 = vrot.slane %v557, 5
      %v801 = vsel %vm482, %v799, %v800
      %v802 = vrot.slane %v758, 5
      %v803 = vrot.slane %v802, 4
      %v804 = vrot.slane %v545, 5
      %v805 = vsel %vm482, %v803, %v804
      %v806 = vrot.slane %v804, 4
      %v807 = vrot.slane %v558, 5
      %v808 = vsel %vm482, %v806, %v807
      %v809 = vrot.slane %v759, 5
      %v810 = vrot.slane %v809, 4
      %v811 = vrot.slane %v547, 5
      %v812 = vsel %vm482, %v810, %v811
      %v813 = vrot.slane %v811, 4
      %v814 = vrot.slane %v559, 5
      %v815 = vsel %vm482, %v813, %v814
      %v816 = vrot.slane %v760, 5
      %v817 = vrot.slane %v816, 4
      %v818 = vrot.slane %v549, 5
      %v819 = vsel %vm482, %v817, %v818
      %v820 = vrot.slane %v818, 4
      %v821 = vrot.slane %v560, 5
      %v822 = vsel %vm482, %v820, %v821
      %v823 = vrot.slane %v761, 5
      %v824 = vrot.slane %v823, 4
      %v825 = vrot.slane %v551, 5
      %v826 = vsel %vm482, %v824, %v825
      %v827 = vrot.slane %v825, 4
      %v828 = vrot.slane %v561, 5
      %v829 = vsel %vm482, %v827, %v828
      %v830 = vrot.slane %v762, 5
      %v831 = vrot.slane %v830, 4
      %v832 = vrot.slane %v553, 5
      %v833 = vsel %vm482, %v831, %v832
      %v834 = vrot.slane %v832, 4
      %v835 = vrot.slane %v562, 5
      %v836 = vsel %vm482, %v834, %v835
      %v837 = vrot.slane %v763, 5
      %v838 = vrot.slane %v837, 4
      %v839 = vrot.slane %v555, 5
      %v840 = vsel %vm482, %v838, %v839
      %v841 = vrot.slane %v839, 4
      %v842 = vrot.slane %v563, 5
      %v843 = vsel %vm482, %v841, %v842
      %s844 = scalar_lea.vmem %s210, 24
      %v845 = vld [vmem:[%s844] sm:$0xf]
      %v846 = vld [vmem:[%s844 + $0x4] sm:$0xf]
      %v847 = vld [vmem:[%s844 + $0xc] sm:$0xf]
      %v848 = vld [vmem:[%s844 + $0x10] sm:$0xf]
      %v849 = vld [vmem:[%s844 + $0x18] sm:$0xf]
      %v850 = vld [vmem:[%s844 + $0x1c] sm:$0xf]
      %v851 = vld [vmem:[%s844 + $0x24] sm:$0xf]
      %v852 = vld [vmem:[%s844 + $0x28] sm:$0xf]
      %v853 = vld [vmem:[%s844 + $0x30] sm:$0xf]
      %v854 = vld [vmem:[%s844 + $0x34] sm:$0xf]
      %v855 = vld [vmem:[%s844 + $0x3c] sm:$0xf]
      %v856 = vld [vmem:[%s844 + $0x40] sm:$0xf]
      %v857 = vld [vmem:[%s844 + $0x48] sm:$0xf]
      %v858 = vld [vmem:[%s844 + $0x4c] sm:$0xf]
      %v859 = vld [vmem:[%s844 + $0x54] sm:$0xf]
      %v860 = vld [vmem:[%s844 + $0x58] sm:$0xf]
      %v861 = vld [vmem:[%s844 + $0x8] sm:$0x1]
      %v862 = vld [vmem:[%s844 + $0x14] sm:$0x1]
      %v863 = vld [vmem:[%s844 + $0x20] sm:$0x1]
      %v864 = vld [vmem:[%s844 + $0x2c] sm:$0x1]
      %v865 = vld [vmem:[%s844 + $0x38] sm:$0x1]
      %v866 = vld [vmem:[%s844 + $0x44] sm:$0x1]
      %v867 = vld [vmem:[%s844 + $0x50] sm:$0x1]
      %v868 = vld [vmem:[%s844 + $0x5c] sm:$0x1]
      %v870 = vshrl.u32 %v845, 16
      %v872 = vrot.slane %v870, 4
      %v873 = vshll.u32 %v845, 16
      %v875 = vrot.slane %v873, 5
      %v876 = vor.u32 %v872, %v875
      %v877 = vrot.slane %v876, 4
      %v879 = vshll.u32 %v846, 16
      %v881 = vrot.slane %v879, 5
      %v882 = vsel %vm255, %v877, %v881
      %v883 = vshrl.u32 %v846, 16
      %v885 = vrot.slane %v883, 4
      %v886 = vor.u32 %v885, %v881
      %v887 = vrot.slane %v886, 4
      %v889 = vshll.u32 %v861, 16
      %v891 = vrot.slane %v889, 5
      %v892 = vsel %vm255, %v887, %v891
      %v894 = vshrl.u32 %v847, 16
      %v896 = vrot.slane %v894, 4
      %v897 = vshll.u32 %v847, 16
      %v899 = vrot.slane %v897, 5
      %v900 = vor.u32 %v896, %v899
      %v901 = vrot.slane %v900, 4
      %v903 = vshll.u32 %v848, 16
      %v905 = vrot.slane %v903, 5
      %v906 = vsel %vm255, %v901, %v905
      %v907 = vshrl.u32 %v848, 16
      %v909 = vrot.slane %v907, 4
      %v910 = vor.u32 %v909, %v905
      %v911 = vrot.slane %v910, 4
      %v913 = vshll.u32 %v862, 16
      %v915 = vrot.slane %v913, 5
      %v916 = vsel %vm255, %v911, %v915
      %v918 = vshrl.u32 %v849, 16
      %v920 = vrot.slane %v918, 4
      %v921 = vshll.u32 %v849, 16
      %v923 = vrot.slane %v921, 5
      %v924 = vor.u32 %v920, %v923
      %v925 = vrot.slane %v924, 4
      %v927 = vshll.u32 %v850, 16
      %v929 = vrot.slane %v927, 5
      %v930 = vsel %vm255, %v925, %v929
      %v931 = vshrl.u32 %v850, 16
      %v933 = vrot.slane %v931, 4
      %v934 = vor.u32 %v933, %v929
      %v935 = vrot.slane %v934, 4
      %v937 = vshll.u32 %v863, 16
      %v939 = vrot.slane %v937, 5
      %v940 = vsel %vm255, %v935, %v939
      %v942 = vshrl.u32 %v851, 16
      %v944 = vrot.slane %v942, 4
      %v945 = vshll.u32 %v851, 16
      %v947 = vrot.slane %v945, 5
      %v948 = vor.u32 %v944, %v947
      %v949 = vrot.slane %v948, 4
      %v951 = vshll.u32 %v852, 16
      %v953 = vrot.slane %v951, 5
      %v954 = vsel %vm255, %v949, %v953
      %v955 = vshrl.u32 %v852, 16
      %v957 = vrot.slane %v955, 4
      %v958 = vor.u32 %v957, %v953
      %v959 = vrot.slane %v958, 4
      %v961 = vshll.u32 %v864, 16
      %v963 = vrot.slane %v961, 5
      %v964 = vsel %vm255, %v959, %v963
      %v966 = vshrl.u32 %v853, 16
      %v968 = vrot.slane %v966, 4
      %v969 = vshll.u32 %v853, 16
      %v971 = vrot.slane %v969, 5
      %v972 = vor.u32 %v968, %v971
      %v973 = vrot.slane %v972, 4
      %v975 = vshll.u32 %v854, 16
      %v977 = vrot.slane %v975, 5
      %v978 = vsel %vm255, %v973, %v977
      %v979 = vshrl.u32 %v854, 16
      %v981 = vrot.slane %v979, 4
      %v982 = vor.u32 %v981, %v977
      %v983 = vrot.slane %v982, 4
      %v985 = vshll.u32 %v865, 16
      %v987 = vrot.slane %v985, 5
      %v988 = vsel %vm255, %v983, %v987
      %v990 = vshrl.u32 %v855, 16
      %v992 = vrot.slane %v990, 4
      %v993 = vshll.u32 %v855, 16
      %v995 = vrot.slane %v993, 5
      %v996 = vor.u32 %v992, %v995
      %v997 = vrot.slane %v996, 4
      %v999 = vshll.u32 %v856, 16
      %v1001 = vrot.slane %v999, 5
      %v1002 = vsel %vm255, %v997, %v1001
      %v1003 = vshrl.u32 %v856, 16
      %v1005 = vrot.slane %v1003, 4
      %v1006 = vor.u32 %v1005, %v1001
      %v1007 = vrot.slane %v1006, 4
      %v1009 = vshll.u32 %v866, 16
      %v1011 = vrot.slane %v1009, 5
      %v1012 = vsel %vm255, %v1007, %v1011
      %v1014 = vshrl.u32 %v857, 16
      %v1016 = vrot.slane %v1014, 4
      %v1017 = vshll.u32 %v857, 16
      %v1019 = vrot.slane %v1017, 5
      %v1020 = vor.u32 %v1016, %v1019
      %v1021 = vrot.slane %v1020, 4
      %v1023 = vshll.u32 %v858, 16
      %v1025 = vrot.slane %v1023, 5
      %v1026 = vsel %vm255, %v1021, %v1025
      %v1027 = vshrl.u32 %v858, 16
      %v1029 = vrot.slane %v1027, 4
      %v1030 = vor.u32 %v1029, %v1025
      %v1031 = vrot.slane %v1030, 4
      %v1033 = vshll.u32 %v867, 16
      %v1035 = vrot.slane %v1033, 5
      %v1036 = vsel %vm255, %v1031, %v1035
      %v1038 = vshrl.u32 %v859, 16
      %v1040 = vrot.slane %v1038, 4
      %v1041 = vshll.u32 %v859, 16
      %v1043 = vrot.slane %v1041, 5
      %v1044 = vor.u32 %v1040, %v1043
      %v1045 = vrot.slane %v1044, 4
      %v1047 = vshll.u32 %v860, 16
      %v1049 = vrot.slane %v1047, 5
      %v1050 = vsel %vm255, %v1045, %v1049
      %v1051 = vshrl.u32 %v860, 16
      %v1053 = vrot.slane %v1051, 4
      %v1054 = vor.u32 %v1053, %v1049
      %v1055 = vrot.slane %v1054, 4
      %v1057 = vshll.u32 %v868, 16
      %v1059 = vrot.slane %v1057, 5
      %v1060 = vsel %vm255, %v1055, %v1059
      %v1061 = vld [vmem:[%s844] sm:$0xe]
      %v1062 = vld [vmem:[%s844 + $0xc] sm:$0xe]
      %v1063 = vld [vmem:[%s844 + $0x18] sm:$0xe]
      %v1064 = vld [vmem:[%s844 + $0x24] sm:$0xe]
      %v1065 = vld [vmem:[%s844 + $0x30] sm:$0xe]
      %v1066 = vld [vmem:[%s844 + $0x3c] sm:$0xe]
      %v1067 = vld [vmem:[%s844 + $0x48] sm:$0xe]
      %v1068 = vld [vmem:[%s844 + $0x54] sm:$0xe]
      %v1093 = vrot.slane %v1061, 5
      %v1094 = vrot.slane %v1093, 4
      %v1095 = vrot.slane %v846, 5
      %v1096 = vsel %vm482, %v1094, %v1095
      %v1097 = vrot.slane %v1095, 4
      %v1098 = vrot.slane %v861, 5
      %v1099 = vsel %vm482, %v1097, %v1098
      %v1100 = vrot.slane %v1062, 5
      %v1101 = vrot.slane %v1100, 4
      %v1102 = vrot.slane %v848, 5
      %v1103 = vsel %vm482, %v1101, %v1102
      %v1104 = vrot.slane %v1102, 4
      %v1105 = vrot.slane %v862, 5
      %v1106 = vsel %vm482, %v1104, %v1105
      %v1107 = vrot.slane %v1063, 5
      %v1108 = vrot.slane %v1107, 4
      %v1109 = vrot.slane %v850, 5
      %v1110 = vsel %vm482, %v1108, %v1109
      %v1111 = vrot.slane %v1109, 4
      %v1112 = vrot.slane %v863, 5
      %v1113 = vsel %vm482, %v1111, %v1112
      %v1114 = vrot.slane %v1064, 5
      %v1115 = vrot.slane %v1114, 4
      %v1116 = vrot.slane %v852, 5
      %v1117 = vsel %vm482, %v1115, %v1116
      %v1118 = vrot.slane %v1116, 4
      %v1119 = vrot.slane %v864, 5
      %v1120 = vsel %vm482, %v1118, %v1119
      %v1121 = vrot.slane %v1065, 5
      %v1122 = vrot.slane %v1121, 4
      %v1123 = vrot.slane %v854, 5
      %v1124 = vsel %vm482, %v1122, %v1123
      %v1125 = vrot.slane %v1123, 4
      %v1126 = vrot.slane %v865, 5
      %v1127 = vsel %vm482, %v1125, %v1126
      %v1128 = vrot.slane %v1066, 5
      %v1129 = vrot.slane %v1128, 4
      %v1130 = vrot.slane %v856, 5
      %v1131 = vsel %vm482, %v1129, %v1130
      %v1132 = vrot.slane %v1130, 4
      %v1133 = vrot.slane %v866, 5
      %v1134 = vsel %vm482, %v1132, %v1133
      %v1135 = vrot.slane %v1067, 5
      %v1136 = vrot.slane %v1135, 4
      %v1137 = vrot.slane %v858, 5
      %v1138 = vsel %vm482, %v1136, %v1137
      %v1139 = vrot.slane %v1137, 4
      %v1140 = vrot.slane %v867, 5
      %v1141 = vsel %vm482, %v1139, %v1140
      %v1142 = vrot.slane %v1068, 5
      %v1143 = vrot.slane %v1142, 4
      %v1144 = vrot.slane %v860, 5
      %v1145 = vsel %vm482, %v1143, %v1144
      %v1146 = vrot.slane %v1144, 4
      %v1147 = vrot.slane %v868, 5
      %v1148 = vsel %vm482, %v1146, %v1147
      %v1157 = vunpack.c.l.b16 %v229
      %v1158 = vunpack.c.l.b16 %v230
      %v1159 = vunpack.c.l.b16 %v231
      %v1160 = vunpack.c.l.b16 %v232
      %v1161 = vunpack.c.l.b16 %v233
      %v1162 = vunpack.c.l.b16 %v234
      %v1163 = vunpack.c.l.b16 %v235
      %v1164 = vunpack.c.l.b16 %v236
      %v1165 = vunpack.c.l.b16 %v237
      %v1166 = vunpack.c.l.b16 %v238
      %v1167 = vunpack.c.l.b16 %v239
      %v1168 = vunpack.c.l.b16 %v240
      %v1169 = vunpack.c.l.b16 %v241
      %v1170 = vunpack.c.l.b16 %v242
      %v1171 = vunpack.c.l.b16 %v243
      %v1172 = vunpack.c.l.b16 %v244
      %v1173 = vpack.c.b16 %v1158, %v1157
      %v1174 = vpack.c.b16 %v1160, %v1159
      %v1175 = vpack.c.b16 %v1162, %v1161
      %v1176 = vpack.c.b16 %v1164, %v1163
      %v1177 = vpack.c.b16 %v1166, %v1165
      %v1178 = vpack.c.b16 %v1168, %v1167
      %v1179 = vpack.c.b16 %v1170, %v1169
      %v1180 = vpack.c.b16 %v1172, %v1171
      %v1181 = vunpack.c.l.b16 %v269
      %v1182 = vunpack.c.l.b16 %v279
      %v1183 = vunpack.c.l.b16 %v293
      %v1184 = vunpack.c.l.b16 %v303
      %v1185 = vunpack.c.l.b16 %v317
      %v1186 = vunpack.c.l.b16 %v327
      %v1187 = vunpack.c.l.b16 %v341
      %v1188 = vunpack.c.l.b16 %v351
      %v1189 = vunpack.c.l.b16 %v365
      %v1190 = vunpack.c.l.b16 %v375
      %v1191 = vunpack.c.l.b16 %v389
      %v1192 = vunpack.c.l.b16 %v399
      %v1193 = vunpack.c.l.b16 %v413
      %v1194 = vunpack.c.l.b16 %v423
      %v1195 = vunpack.c.l.b16 %v437
      %v1196 = vunpack.c.l.b16 %v447
      %v1197 = vpack.c.b16 %v1182, %v1181
      %v1198 = vpack.c.b16 %v1184, %v1183
      %v1199 = vpack.c.b16 %v1186, %v1185
      %v1200 = vpack.c.b16 %v1188, %v1187
      %v1201 = vpack.c.b16 %v1190, %v1189
      %v1202 = vpack.c.b16 %v1192, %v1191
      %v1203 = vpack.c.b16 %v1194, %v1193
      %v1204 = vpack.c.b16 %v1196, %v1195
      %1205 = vrot.lane.b32.xlu0 %v1197, 4
      %v1206 = vpop.permute.xlu0 %1205
      %1207 = vrot.lane.b32.xlu0 %v1198, 4
      %v1208 = vpop.permute.xlu0 %1207
      %1209 = vrot.lane.b32.xlu0 %v1199, 4
      %v1210 = vpop.permute.xlu0 %1209
      %1211 = vrot.lane.b32.xlu0 %v1200, 4
      %v1212 = vpop.permute.xlu0 %1211
      %1213 = vrot.lane.b32.xlu0 %v1201, 4
      %v1214 = vpop.permute.xlu0 %1213
      %1215 = vrot.lane.b32.xlu0 %v1202, 4
      %v1216 = vpop.permute.xlu0 %1215
      %1217 = vrot.lane.b32.xlu0 %v1203, 4
      %v1218 = vpop.permute.xlu0 %1217
      %1219 = vrot.lane.b32.xlu0 %v1204, 4
      %v1220 = vpop.permute.xlu0 %1219
      %v1221 = vunpack.c.l.b16 %v486
      %v1222 = vunpack.c.l.b16 %v489
      %v1223 = vunpack.c.l.b16 %v493
      %v1224 = vunpack.c.l.b16 %v496
      %v1225 = vunpack.c.l.b16 %v500
      %v1226 = vunpack.c.l.b16 %v503
      %v1227 = vunpack.c.l.b16 %v507
      %v1228 = vunpack.c.l.b16 %v510
      %v1229 = vunpack.c.l.b16 %v514
      %v1230 = vunpack.c.l.b16 %v517
      %v1231 = vunpack.c.l.b16 %v521
      %v1232 = vunpack.c.l.b16 %v524
      %v1233 = vunpack.c.l.b16 %v528
      %v1234 = vunpack.c.l.b16 %v531
      %v1235 = vunpack.c.l.b16 %v535
      %v1236 = vunpack.c.l.b16 %v538
      %v1237 = vpack.c.b16 %v1222, %v1221
      %v1238 = vpack.c.b16 %v1224, %v1223
      %v1239 = vpack.c.b16 %v1226, %v1225
      %v1240 = vpack.c.b16 %v1228, %v1227
      %v1241 = vpack.c.b16 %v1230, %v1229
      %v1242 = vpack.c.b16 %v1232, %v1231
      %v1243 = vpack.c.b16 %v1234, %v1233
      %v1244 = vpack.c.b16 %v1236, %v1235
      %1245 = vrot.lane.b32.xlu0 %v1237, 8
      %v1246 = vpop.permute.xlu0 %1245
      %1247 = vrot.lane.b32.xlu0 %v1238, 8
      %v1248 = vpop.permute.xlu0 %1247
      %1249 = vrot.lane.b32.xlu0 %v1239, 8
      %v1250 = vpop.permute.xlu0 %1249
      %1251 = vrot.lane.b32.xlu0 %v1240, 8
      %v1252 = vpop.permute.xlu0 %1251
      %1253 = vrot.lane.b32.xlu0 %v1241, 8
      %v1254 = vpop.permute.xlu0 %1253
      %1255 = vrot.lane.b32.xlu0 %v1242, 8
      %v1256 = vpop.permute.xlu0 %1255
      %1257 = vrot.lane.b32.xlu0 %v1243, 8
      %v1258 = vpop.permute.xlu0 %1257
      %1259 = vrot.lane.b32.xlu0 %v1244, 8
      %v1260 = vpop.permute.xlu0 %1259
      %v1269 = vunpack.c.l.b16 %v540
      %v1270 = vunpack.c.l.b16 %v541
      %v1271 = vunpack.c.l.b16 %v542
      %v1272 = vunpack.c.l.b16 %v543
      %v1273 = vunpack.c.l.b16 %v544
      %v1274 = vunpack.c.l.b16 %v545
      %v1275 = vunpack.c.l.b16 %v546
      %v1276 = vunpack.c.l.b16 %v547
      %v1277 = vunpack.c.l.b16 %v548
      %v1278 = vunpack.c.l.b16 %v549
      %v1279 = vunpack.c.l.b16 %v550
      %v1280 = vunpack.c.l.b16 %v551
      %v1281 = vunpack.c.l.b16 %v552
      %v1282 = vunpack.c.l.b16 %v553
      %v1283 = vunpack.c.l.b16 %v554
      %v1284 = vunpack.c.l.b16 %v555
      %v1285 = vpack.c.b16 %v1270, %v1269
      %v1286 = vpack.c.b16 %v1272, %v1271
      %v1287 = vpack.c.b16 %v1274, %v1273
      %v1288 = vpack.c.b16 %v1276, %v1275
      %v1289 = vpack.c.b16 %v1278, %v1277
      %v1290 = vpack.c.b16 %v1280, %v1279
      %v1291 = vpack.c.b16 %v1282, %v1281
      %v1292 = vpack.c.b16 %v1284, %v1283
      %1293 = vrot.lane.b32.xlu0 %v1285, 12
      %v1294 = vpop.permute.xlu0 %1293
      %1295 = vrot.lane.b32.xlu0 %v1286, 12
      %v1296 = vpop.permute.xlu0 %1295
      %1297 = vrot.lane.b32.xlu0 %v1287, 12
      %v1298 = vpop.permute.xlu0 %1297
      %1299 = vrot.lane.b32.xlu0 %v1288, 12
      %v1300 = vpop.permute.xlu0 %1299
      %1301 = vrot.lane.b32.xlu0 %v1289, 12
      %v1302 = vpop.permute.xlu0 %1301
      %1303 = vrot.lane.b32.xlu0 %v1290, 12
      %v1304 = vpop.permute.xlu0 %1303
      %1305 = vrot.lane.b32.xlu0 %v1291, 12
      %v1306 = vpop.permute.xlu0 %1305
      %1307 = vrot.lane.b32.xlu0 %v1292, 12
      %v1308 = vpop.permute.xlu0 %1307
      %v1309 = vunpack.c.l.b16 %v577
      %v1310 = vunpack.c.l.b16 %v587
      %v1311 = vunpack.c.l.b16 %v601
      %v1312 = vunpack.c.l.b16 %v611
      %v1313 = vunpack.c.l.b16 %v625
      %v1314 = vunpack.c.l.b16 %v635
      %v1315 = vunpack.c.l.b16 %v649
      %v1316 = vunpack.c.l.b16 %v659
      %v1317 = vunpack.c.l.b16 %v673
      %v1318 = vunpack.c.l.b16 %v683
      %v1319 = vunpack.c.l.b16 %v697
      %v1320 = vunpack.c.l.b16 %v707
      %v1321 = vunpack.c.l.b16 %v721
      %v1322 = vunpack.c.l.b16 %v731
      %v1323 = vunpack.c.l.b16 %v745
      %v1324 = vunpack.c.l.b16 %v755
      %v1325 = vpack.c.b16 %v1310, %v1309
      %v1326 = vpack.c.b16 %v1312, %v1311
      %v1327 = vpack.c.b16 %v1314, %v1313
      %v1328 = vpack.c.b16 %v1316, %v1315
      %v1329 = vpack.c.b16 %v1318, %v1317
      %v1330 = vpack.c.b16 %v1320, %v1319
      %v1331 = vpack.c.b16 %v1322, %v1321
      %v1332 = vpack.c.b16 %v1324, %v1323
      %1333 = vrot.lane.b32.xlu0 %v1325, 16
      %v1334 = vpop.permute.xlu0 %1333
      %1335 = vrot.lane.b32.xlu0 %v1326, 16
      %v1336 = vpop.permute.xlu0 %1335
      %1337 = vrot.lane.b32.xlu0 %v1327, 16
      %v1338 = vpop.permute.xlu0 %1337
      %1339 = vrot.lane.b32.xlu0 %v1328, 16
      %v1340 = vpop.permute.xlu0 %1339
      %1341 = vrot.lane.b32.xlu0 %v1329, 16
      %v1342 = vpop.permute.xlu0 %1341
      %1343 = vrot.lane.b32.xlu0 %v1330, 16
      %v1344 = vpop.permute.xlu0 %1343
      %1345 = vrot.lane.b32.xlu0 %v1331, 16
      %v1346 = vpop.permute.xlu0 %1345
      %1347 = vrot.lane.b32.xlu0 %v1332, 16
      %v1348 = vpop.permute.xlu0 %1347
      %v1349 = vunpack.c.l.b16 %v791
      %v1350 = vunpack.c.l.b16 %v794
      %v1351 = vunpack.c.l.b16 %v798
      %v1352 = vunpack.c.l.b16 %v801
      %v1353 = vunpack.c.l.b16 %v805
      %v1354 = vunpack.c.l.b16 %v808
      %v1355 = vunpack.c.l.b16 %v812
      %v1356 = vunpack.c.l.b16 %v815
      %v1357 = vunpack.c.l.b16 %v819
      %v1358 = vunpack.c.l.b16 %v822
      %v1359 = vunpack.c.l.b16 %v826
      %v1360 = vunpack.c.l.b16 %v829
      %v1361 = vunpack.c.l.b16 %v833
      %v1362 = vunpack.c.l.b16 %v836
      %v1363 = vunpack.c.l.b16 %v840
      %v1364 = vunpack.c.l.b16 %v843
      %v1365 = vpack.c.b16 %v1350, %v1349
      %v1366 = vpack.c.b16 %v1352, %v1351
      %v1367 = vpack.c.b16 %v1354, %v1353
      %v1368 = vpack.c.b16 %v1356, %v1355
      %v1369 = vpack.c.b16 %v1358, %v1357
      %v1370 = vpack.c.b16 %v1360, %v1359
      %v1371 = vpack.c.b16 %v1362, %v1361
      %v1372 = vpack.c.b16 %v1364, %v1363
      %1373 = vrot.lane.b32.xlu0 %v1365, 20
      %v1374 = vpop.permute.xlu0 %1373
      %1375 = vrot.lane.b32.xlu0 %v1366, 20
      %v1376 = vpop.permute.xlu0 %1375
      %1377 = vrot.lane.b32.xlu0 %v1367, 20
      %v1378 = vpop.permute.xlu0 %1377
      %1379 = vrot.lane.b32.xlu0 %v1368, 20
      %v1380 = vpop.permute.xlu0 %1379
      %1381 = vrot.lane.b32.xlu0 %v1369, 20
      %v1382 = vpop.permute.xlu0 %1381
      %1383 = vrot.lane.b32.xlu0 %v1370, 20
      %v1384 = vpop.permute.xlu0 %1383
      %1385 = vrot.lane.b32.xlu0 %v1371, 20
      %v1386 = vpop.permute.xlu0 %1385
      %1387 = vrot.lane.b32.xlu0 %v1372, 20
      %v1388 = vpop.permute.xlu0 %1387
      %v1397 = vunpack.c.l.b16 %v845
      %v1398 = vunpack.c.l.b16 %v846
      %v1399 = vunpack.c.l.b16 %v847
      %v1400 = vunpack.c.l.b16 %v848
      %v1401 = vunpack.c.l.b16 %v849
      %v1402 = vunpack.c.l.b16 %v850
      %v1403 = vunpack.c.l.b16 %v851
      %v1404 = vunpack.c.l.b16 %v852
      %v1405 = vunpack.c.l.b16 %v853
      %v1406 = vunpack.c.l.b16 %v854
      %v1407 = vunpack.c.l.b16 %v855
      %v1408 = vunpack.c.l.b16 %v856
      %v1409 = vunpack.c.l.b16 %v857
      %v1410 = vunpack.c.l.b16 %v858
      %v1411 = vunpack.c.l.b16 %v859
      %v1412 = vunpack.c.l.b16 %v860
      %v1413 = vpack.c.b16 %v1398, %v1397
      %v1414 = vpack.c.b16 %v1400, %v1399
      %v1415 = vpack.c.b16 %v1402, %v1401
      %v1416 = vpack.c.b16 %v1404, %v1403
      %v1417 = vpack.c.b16 %v1406, %v1405
      %v1418 = vpack.c.b16 %v1408, %v1407
      %v1419 = vpack.c.b16 %v1410, %v1409
      %v1420 = vpack.c.b16 %v1412, %v1411
      %1421 = vrot.lane.b32.xlu0 %v1413, 24
      %v1422 = vpop.permute.xlu0 %1421
      %1423 = vrot.lane.b32.xlu0 %v1414, 24
      %v1424 = vpop.permute.xlu0 %1423
      %1425 = vrot.lane.b32.xlu0 %v1415, 24
      %v1426 = vpop.permute.xlu0 %1425
      %1427 = vrot.lane.b32.xlu0 %v1416, 24
      %v1428 = vpop.permute.xlu0 %1427
      %1429 = vrot.lane.b32.xlu0 %v1417, 24
      %v1430 = vpop.permute.xlu0 %1429
      %1431 = vrot.lane.b32.xlu0 %v1418, 24
      %v1432 = vpop.permute.xlu0 %1431
      %1433 = vrot.lane.b32.xlu0 %v1419, 24
      %v1434 = vpop.permute.xlu0 %1433
      %1435 = vrot.lane.b32.xlu0 %v1420, 24
      %v1436 = vpop.permute.xlu0 %1435
      %v1437 = vunpack.c.l.b16 %v882
      %v1438 = vunpack.c.l.b16 %v892
      %v1439 = vunpack.c.l.b16 %v906
      %v1440 = vunpack.c.l.b16 %v916
      %v1441 = vunpack.c.l.b16 %v930
      %v1442 = vunpack.c.l.b16 %v940
      %v1443 = vunpack.c.l.b16 %v954
      %v1444 = vunpack.c.l.b16 %v964
      %v1445 = vunpack.c.l.b16 %v978
      %v1446 = vunpack.c.l.b16 %v988
      %v1447 = vunpack.c.l.b16 %v1002
      %v1448 = vunpack.c.l.b16 %v1012
      %v1449 = vunpack.c.l.b16 %v1026
      %v1450 = vunpack.c.l.b16 %v1036
      %v1451 = vunpack.c.l.b16 %v1050
      %v1452 = vunpack.c.l.b16 %v1060
      %v1453 = vpack.c.b16 %v1438, %v1437
      %v1454 = vpack.c.b16 %v1440, %v1439
      %v1455 = vpack.c.b16 %v1442, %v1441
      %v1456 = vpack.c.b16 %v1444, %v1443
      %v1457 = vpack.c.b16 %v1446, %v1445
      %v1458 = vpack.c.b16 %v1448, %v1447
      %v1459 = vpack.c.b16 %v1450, %v1449
      %v1460 = vpack.c.b16 %v1452, %v1451
      %1461 = vrot.lane.b32.xlu0 %v1453, 28
      %v1462 = vpop.permute.xlu0 %1461
      %1463 = vrot.lane.b32.xlu0 %v1454, 28
      %v1464 = vpop.permute.xlu0 %1463
      %1465 = vrot.lane.b32.xlu0 %v1455, 28
      %v1466 = vpop.permute.xlu0 %1465
      %1467 = vrot.lane.b32.xlu0 %v1456, 28
      %v1468 = vpop.permute.xlu0 %1467
      %1469 = vrot.lane.b32.xlu0 %v1457, 28
      %v1470 = vpop.permute.xlu0 %1469
      %1471 = vrot.lane.b32.xlu0 %v1458, 28
      %v1472 = vpop.permute.xlu0 %1471
      %1473 = vrot.lane.b32.xlu0 %v1459, 28
      %v1474 = vpop.permute.xlu0 %1473
      %1475 = vrot.lane.b32.xlu0 %v1460, 28
      %v1476 = vpop.permute.xlu0 %1475
      %v1477 = vunpack.c.l.b16 %v1096
      %v1478 = vunpack.c.l.b16 %v1099
      %v1479 = vunpack.c.l.b16 %v1103
      %v1480 = vunpack.c.l.b16 %v1106
      %v1481 = vunpack.c.l.b16 %v1110
      %v1482 = vunpack.c.l.b16 %v1113
      %v1483 = vunpack.c.l.b16 %v1117
      %v1484 = vunpack.c.l.b16 %v1120
      %v1485 = vunpack.c.l.b16 %v1124
      %v1486 = vunpack.c.l.b16 %v1127
      %v1487 = vunpack.c.l.b16 %v1131
      %v1488 = vunpack.c.l.b16 %v1134
      %v1489 = vunpack.c.l.b16 %v1138
      %v1490 = vunpack.c.l.b16 %v1141
      %v1491 = vunpack.c.l.b16 %v1145
      %v1492 = vunpack.c.l.b16 %v1148
      %v1493 = vpack.c.b16 %v1478, %v1477
      %v1494 = vpack.c.b16 %v1480, %v1479
      %v1495 = vpack.c.b16 %v1482, %v1481
      %v1496 = vpack.c.b16 %v1484, %v1483
      %v1497 = vpack.c.b16 %v1486, %v1485
      %v1498 = vpack.c.b16 %v1488, %v1487
      %v1499 = vpack.c.b16 %v1490, %v1489
      %v1500 = vpack.c.b16 %v1492, %v1491
      %1501 = vrot.lane.b32.xlu0 %v1493, 32
      %v1502 = vpop.permute.xlu0 %1501
      %1503 = vrot.lane.b32.xlu0 %v1494, 32
      %v1504 = vpop.permute.xlu0 %1503
      %1505 = vrot.lane.b32.xlu0 %v1495, 32
      %v1506 = vpop.permute.xlu0 %1505
      %1507 = vrot.lane.b32.xlu0 %v1496, 32
      %v1508 = vpop.permute.xlu0 %1507
      %1509 = vrot.lane.b32.xlu0 %v1497, 32
      %v1510 = vpop.permute.xlu0 %1509
      %1511 = vrot.lane.b32.xlu0 %v1498, 32
      %v1512 = vpop.permute.xlu0 %1511
      %1513 = vrot.lane.b32.xlu0 %v1499, 32
      %v1514 = vpop.permute.xlu0 %1513
      %1515 = vrot.lane.b32.xlu0 %v1500, 32
      %v1516 = vpop.permute.xlu0 %1515
      %vm1517 = vcmask 31744
      %v1520 = vsel %vm1517, %v1173, %v1206
      %v1523 = vsel %vm1517, %v1174, %v1208
      %v1526 = vsel %vm1517, %v1175, %v1210
      %v1529 = vsel %vm1517, %v1176, %v1212
      %v1532 = vsel %vm1517, %v1177, %v1214
      %v1535 = vsel %vm1517, %v1178, %v1216
      %v1538 = vsel %vm1517, %v1179, %v1218
      %v1541 = vsel %vm1517, %v1180, %v1220
      %vm1542 = vcmask 64512
      %v1544 = vsel %vm1542, %v1520, %v1246
      %v1546 = vsel %vm1542, %v1523, %v1248
      %v1548 = vsel %vm1542, %v1526, %v1250
      %v1550 = vsel %vm1542, %v1529, %v1252
      %v1552 = vsel %vm1542, %v1532, %v1254
      %v1554 = vsel %vm1542, %v1535, %v1256
      %v1556 = vsel %vm1542, %v1538, %v1258
      %v1558 = vsel %vm1542, %v1541, %v1260
      %vm1559 = vcmask 97280
      %v1561 = vsel %vm1559, %v1544, %v1294
      %v1563 = vsel %vm1559, %v1546, %v1296
      %v1565 = vsel %vm1559, %v1548, %v1298
      %v1567 = vsel %vm1559, %v1550, %v1300
      %v1569 = vsel %vm1559, %v1552, %v1302
      %v1571 = vsel %vm1559, %v1554, %v1304
      %v1573 = vsel %vm1559, %v1556, %v1306
      %v1575 = vsel %vm1559, %v1558, %v1308
      %vm1576 = vcmask 130048
      %v1578 = vsel %vm1576, %v1561, %v1334
      %v1580 = vsel %vm1576, %v1563, %v1336
      %v1582 = vsel %vm1576, %v1565, %v1338
      %v1584 = vsel %vm1576, %v1567, %v1340
      %v1586 = vsel %vm1576, %v1569, %v1342
      %v1588 = vsel %vm1576, %v1571, %v1344
      %v1590 = vsel %vm1576, %v1573, %v1346
      %v1592 = vsel %vm1576, %v1575, %v1348
      %vm1593 = vcmask 162816
      %v1595 = vsel %vm1593, %v1578, %v1374
      %v1597 = vsel %vm1593, %v1580, %v1376
      %v1599 = vsel %vm1593, %v1582, %v1378
      %v1601 = vsel %vm1593, %v1584, %v1380
      %v1603 = vsel %vm1593, %v1586, %v1382
      %v1605 = vsel %vm1593, %v1588, %v1384
      %v1607 = vsel %vm1593, %v1590, %v1386
      %v1609 = vsel %vm1593, %v1592, %v1388
      %vm1610 = vcmask 195584
      %v1612 = vsel %vm1610, %v1595, %v1422
      %v1614 = vsel %vm1610, %v1597, %v1424
      %v1616 = vsel %vm1610, %v1599, %v1426
      %v1618 = vsel %vm1610, %v1601, %v1428
      %v1620 = vsel %vm1610, %v1603, %v1430
      %v1622 = vsel %vm1610, %v1605, %v1432
      %v1624 = vsel %vm1610, %v1607, %v1434
      %v1626 = vsel %vm1610, %v1609, %v1436
      %vm1627 = vcmask 228352
      %v1629 = vsel %vm1627, %v1612, %v1462
      %v1631 = vsel %vm1627, %v1614, %v1464
      %v1633 = vsel %vm1627, %v1616, %v1466
      %v1635 = vsel %vm1627, %v1618, %v1468
      %v1637 = vsel %vm1627, %v1620, %v1470
      %v1639 = vsel %vm1627, %v1622, %v1472
      %v1641 = vsel %vm1627, %v1624, %v1474
      %v1643 = vsel %vm1627, %v1626, %v1476
      %vm1644 = vcmask 261120
      %v1646 = vsel %vm1644, %v1629, %v1502
      %v1648 = vsel %vm1644, %v1631, %v1504
      %v1650 = vsel %vm1644, %v1633, %v1506
      %v1652 = vsel %vm1644, %v1635, %v1508
      %v1654 = vsel %vm1644, %v1637, %v1510
      %v1656 = vsel %vm1644, %v1639, %v1512
      %v1658 = vsel %vm1644, %v1641, %v1514
      %v1660 = vsel %vm1644, %v1643, %v1516
      %v1661 = vld [vmem:[%s1] sm:$0xf]
      %v1662 = vld [vmem:[%s1 + $0x4] sm:$0xf]
      %v1663 = vld [vmem:[%s1 + $0x8] sm:$0xf]
      %v1664 = vld [vmem:[%s1 + $0xc] sm:$0xf]
      %v1665 = vld [vmem:[%s1 + $0x10] sm:$0x3]
      %v1671 = vunpack.c.l.b16 %v1661
      %v1672 = vunpack.c.l.b16 %v1662
      %v1673 = vunpack.c.l.b16 %v1663
      %v1674 = vunpack.c.l.b16 %v1664
      %v1675 = vunpack.c.l.b16 %v1665
      %v1676 = vpack.c.b16 %v1672, %v1671
      %v1677 = vpack.c.b16 %v1674, %v1673
      %v1678 = vpack.c.b16 %v1675, %v1675
      %vm1681 = vcmask 293888
      %v1682 = vsel %vm1681, %v1646, 0
      %v1684 = vsel %vm1681, %v1648, 0
      %v1686 = vsel %vm1681, %v1650, 0
      %v1688 = vsel %vm1681, %v1652, 0
      %v1690 = vsel %vm1681, %v1654, 0
      %v1692 = vsel %vm1681, %v1656, 0
      %v1694 = vsel %vm1681, %v1658, 0
      %v1696 = vsel %vm1681, %v1660, 0
      %vm1698 = vcmask 1041408
      %v1700 = vsel %vm1698, %v1678, 0
      %1702 = vmatprep.subr.bf16.mxu0 0
      %1703 = vmatpush1.bf16.msra.mxu0 %v1676
      %1704 = vmatprep.subr.bf16.mxu0 0
      %1705 = vmatpush1.bf16.msra.mxu0 %v1677
      %1706 = vmatprep.subr.bf16.mxu0 0
      %1707 = vmatpush1.bf16.msra.mxu0 %v1700
      %1708 = vmatprep.subr.bf16.mxu0 0
      %1709 = vmatpush1.bf16.msra.mxu0 0
      %1710 = vmatprep.subr.bf16.mxu0 0
      %1711 = vmatpush1.bf16.msra.mxu0 0
      %1712 = vmatprep.subr.bf16.mxu0 0
      %1713 = vmatpush1.bf16.msra.mxu0 0
      %1714 = vmatprep.subr.bf16.mxu0 0
      %1715 = vmatpush1.bf16.msra.mxu0 0
      %1716 = vmatprep.subr.bf16.mxu0 0
      %1717 = vmatpush1.bf16.msra.mxu0 0
      %1718 = vmatprep.subr.bf16.mxu0 0
      %1719 = vmatpush1.bf16.msra.mxu0 0
      %1720 = vmatprep.subr.bf16.mxu0 0
      %1721 = vmatpush1.bf16.msra.mxu0 0
      %1722 = vmatprep.subr.bf16.mxu0 0
      %1723 = vmatpush1.bf16.msra.mxu0 0
      %1724 = vmatprep.subr.bf16.mxu0 0
      %1725 = vmatpush1.bf16.msra.mxu0 0
      %1726 = vmatprep.subr.bf16.mxu0 0
      %1727 = vmatpush1.bf16.msra.mxu0 0
      %1728 = vmatprep.subr.bf16.mxu0 0
      %1729 = vmatpush1.bf16.msra.mxu0 0
      %1730 = vmatprep.subr.bf16.mxu0 0
      %1731 = vmatpush1.bf16.msra.mxu0 0
      %1732 = vmatprep.subr.bf16.mxu0 0
      %1733 = vmatpush1.bf16.msra.mxu0 0
      %1734 = vmatprep.mubr.bf16.mxu0 0
      %1735 = vmatmul.mubr.bf16.gmra.mrb[0].mxu0 %v1682
      %v1736 = vpop.f32.mrb[0].mxu0
      %v1737 = vadd.f32 0.0, %v1736
      %v1738 = vpop.f32.mrb[0].mxu0
      %v1739 = vpop.f32.mrb[0].mxu0
      %v1740 = vadd.f32 0.0, %v1739
      %v1741 = vpop.f32.mrb[0].mxu0
      %1742 = vmatprep.mubr.bf16.mxu0 0
      %1743 = vmatmul.mubr.bf16.gmra.mrb[0].mxu0 %v1684
      %v1744 = vpop.f32.mrb[0].mxu0
      %v1745 = vadd.f32 0.0, %v1744
      %v1746 = vpop.f32.mrb[0].mxu0
      %v1747 = vpop.f32.mrb[0].mxu0
      %v1748 = vadd.f32 0.0, %v1747
      %v1749 = vpop.f32.mrb[0].mxu0
      %1750 = vmatprep.mubr.bf16.mxu0 0
      %1751 = vmatmul.mubr.bf16.gmra.mrb[0].mxu0 %v1686
      %v1752 = vpop.f32.mrb[0].mxu0
      %v1753 = vadd.f32 0.0, %v1752
      %v1754 = vpop.f32.mrb[0].mxu0
      %v1755 = vpop.f32.mrb[0].mxu0
      %v1756 = vadd.f32 0.0, %v1755
      %v1757 = vpop.f32.mrb[0].mxu0
      %1758 = vmatprep.mubr.bf16.mxu0 0
      %1759 = vmatmul.mubr.bf16.gmra.mrb[0].mxu0 %v1688
      %v1760 = vpop.f32.mrb[0].mxu0
      %v1761 = vadd.f32 0.0, %v1760
      %v1762 = vpop.f32.mrb[0].mxu0
      %v1763 = vpop.f32.mrb[0].mxu0
      %v1764 = vadd.f32 0.0, %v1763
      %v1765 = vpop.f32.mrb[0].mxu0
      %1766 = vmatprep.mubr.bf16.mxu0 0
      %1767 = vmatmul.mubr.bf16.gmra.mrb[0].mxu0 %v1690
      %v1768 = vpop.f32.mrb[0].mxu0
      %v1769 = vadd.f32 0.0, %v1768
      %v1770 = vpop.f32.mrb[0].mxu0
      %v1771 = vpop.f32.mrb[0].mxu0
      %v1772 = vadd.f32 0.0, %v1771
      %v1773 = vpop.f32.mrb[0].mxu0
      %1774 = vmatprep.mubr.bf16.mxu0 0
      %1775 = vmatmul.mubr.bf16.gmra.mrb[0].mxu0 %v1692
      %v1776 = vpop.f32.mrb[0].mxu0
      %v1777 = vadd.f32 0.0, %v1776
      %v1778 = vpop.f32.mrb[0].mxu0
      %v1779 = vpop.f32.mrb[0].mxu0
      %v1780 = vadd.f32 0.0, %v1779
      %v1781 = vpop.f32.mrb[0].mxu0
      %1782 = vmatprep.mubr.bf16.mxu0 0
      %1783 = vmatmul.mubr.bf16.gmra.mrb[0].mxu0 %v1694
      %v1784 = vpop.f32.mrb[0].mxu0
      %v1785 = vadd.f32 0.0, %v1784
      %v1786 = vpop.f32.mrb[0].mxu0
      %v1787 = vpop.f32.mrb[0].mxu0
      %v1788 = vadd.f32 0.0, %v1787
      %v1789 = vpop.f32.mrb[0].mxu0
      %1790 = vmatprep.mubr.bf16.mxu0 0
      %1791 = vmatmul.mubr.bf16.gmra.mrb[0].mxu0 %v1696
      %v1792 = vpop.f32.mrb[0].mxu0
      %v1793 = vadd.f32 0.0, %v1792
      %v1794 = vpop.f32.mrb[0].mxu0
      %v1795 = vpop.f32.mrb[0].mxu0
      %v1796 = vadd.f32 0.0, %v1795
      %v1797 = vpop.f32.mrb[0].mxu0
      %1798 = vdwg.mxu0
      %1799 = vst [vmem:[%s219] sm:$0xff] %v1737
      %1800 = vst [vmem:[%s219 + $0x8] sm:$0xff] %v1740
      %1801 = vst [vmem:[%s219 + $0x10] sm:$0xff] %v1745
      %1802 = vst [vmem:[%s219 + $0x18] sm:$0xff] %v1748
      %1803 = vst [vmem:[%s219 + $0x20] sm:$0xff] %v1753
      %1804 = vst [vmem:[%s219 + $0x28] sm:$0xff] %v1756
      %1805 = vst [vmem:[%s219 + $0x30] sm:$0xff] %v1761
      %1806 = vst [vmem:[%s219 + $0x38] sm:$0xff] %v1764
      %1807 = vst [vmem:[%s219 + $0x40] sm:$0xff] %v1769
      %1808 = vst [vmem:[%s219 + $0x48] sm:$0xff] %v1772
      %1809 = vst [vmem:[%s219 + $0x50] sm:$0xff] %v1777
      %1810 = vst [vmem:[%s219 + $0x58] sm:$0xff] %v1780
      %1811 = vst [vmem:[%s219 + $0x60] sm:$0xff] %v1785
      %1812 = vst [vmem:[%s219 + $0x68] sm:$0xff] %v1788
      %1813 = vst [vmem:[%s219 + $0x70] sm:$0xff] %v1793
      %1814 = vst [vmem:[%s219 + $0x78] sm:$0xff] %v1796
      %v1815 = vadd.f32 %v1737, %v1740
      %v1816 = vadd.f32 %v1815, %v1745
      %v1817 = vadd.f32 %v1816, %v1748
      %v1818 = vadd.f32 %v1817, %v1753
      %v1819 = vadd.f32 %v1818, %v1756
      %v1820 = vadd.f32 %v1819, %v1761
      %v1821 = vadd.f32 %v1820, %v1764
      %v1822 = vadd.f32 %v1821, %v1769
      %v1823 = vadd.f32 %v1822, %v1772
      %v1824 = vadd.f32 %v1823, %v1777
      %v1825 = vadd.f32 %v1824, %v1780
      %v1826 = vadd.f32 %v1825, %v1785
      %v1827 = vadd.f32 %v1826, %v1788
      %v1828 = vadd.f32 %v1827, %v1793
      %v1829 = vadd.f32 %v1828, %v1796
      %v1830 = vrot.slane %v1829, 4
      %v1831 = vadd.f32 %v1829, %v1830
      %v1832 = vrot.slane %v1831, 2
      %v1833 = vadd.f32 %v1831, %v1832
      %v1834 = vrot.slane %v1833, 1
      %v1835 = vadd.f32 %v1833, %v1834
      %v1836 = vmul.f32 %v1737, %v1737
      %v1837 = vmul.f32 %v1740, %v1740
      %v1838 = vmul.f32 %v1745, %v1745
      %v1839 = vmul.f32 %v1748, %v1748
      %v1840 = vmul.f32 %v1753, %v1753
      %v1841 = vmul.f32 %v1756, %v1756
      %v1842 = vmul.f32 %v1761, %v1761
      %v1843 = vmul.f32 %v1764, %v1764
      %v1844 = vmul.f32 %v1769, %v1769
      %v1845 = vmul.f32 %v1772, %v1772
      %v1846 = vmul.f32 %v1777, %v1777
      %v1847 = vmul.f32 %v1780, %v1780
      %v1848 = vmul.f32 %v1785, %v1785
      %v1849 = vmul.f32 %v1788, %v1788
      %v1850 = vmul.f32 %v1793, %v1793
      %v1851 = vmul.f32 %v1796, %v1796
      %v1852 = vadd.f32 %v1836, %v1837
      %v1853 = vadd.f32 %v1852, %v1838
      %v1854 = vadd.f32 %v1853, %v1839
      %v1855 = vadd.f32 %v1854, %v1840
      %v1856 = vadd.f32 %v1855, %v1841
      %v1857 = vadd.f32 %v1856, %v1842
      %v1858 = vadd.f32 %v1857, %v1843
      %v1859 = vadd.f32 %v1858, %v1844
      %v1860 = vadd.f32 %v1859, %v1845
      %v1861 = vadd.f32 %v1860, %v1846
      %v1862 = vadd.f32 %v1861, %v1847
      %v1863 = vadd.f32 %v1862, %v1848
      %v1864 = vadd.f32 %v1863, %v1849
      %v1865 = vadd.f32 %v1864, %v1850
      %v1866 = vadd.f32 %v1865, %v1851
      %v1867 = vrot.slane %v1866, 4
      %v1868 = vadd.f32 %v1866, %v1867
      %v1869 = vrot.slane %v1868, 2
      %v1870 = vadd.f32 %v1868, %v1869
      %v1871 = vrot.slane %v1870, 1
      %v1872 = vadd.f32 %v1870, %v1871
      %vm1873 = vcmask 1040384
      %v1874 = vsel %vm1873, %v1835, %v1872
      %1875 = vst [vmem:[%s227] sm:$0x3] %v1874
      %p1876 = scmp.lt.s32.totalorder %s19, 1
      %s1877 = scalar_select %p1876, %s19, 1
      %p1878 = scmp.lt.s32.totalorder %s20, 1
      %s1879 = scalar_select %p1878, %s20, 1
      %s1880 = smul.addr %s1879, 16
      %s1881 = smul.addr %s1877, 32
      %s1882 = sadd.s32 %s1880, %s1881
      %s1883 = smul.addr %s1882, 8
      %s1884 = scalar_lea.vmem %s2, %s1883
      %p1885 = scmp.lt.s32.totalorder %s19, 1
      %s1886 = scalar_select %p1885, %s19, 1
      %p1887 = scmp.lt.s32.totalorder %s20, 1
      %s1888 = scalar_select %p1887, %s20, 1
      %s1889 = smul.addr %s1886, 2
      %s1890 = sadd.s32 %s1888, %s1889
      %s1891 = smul.addr %s1890, 2
      %s1892 = scalar_lea.vmem %s3, %s1891
      // Predicated region
      $region29: #{signle_conv.2} parent=27 // pred_check
        %p1893 = pneg %p96
      $region30: #{signle_conv.2} parent=27 // pred_check_branch
        %1895 = sbr.rel (%p1893) target = $region32
      $region31: #{signle_conv.2} parent=27 // pred_region
        _
      $region32: #{signle_conv.2} parent=27 // pred_fallthru
        _
      // Predicated region
      $region33: #{signle_conv.2} parent=27 // pred_check
        %p1896 = pneg %p124
      $region34: #{signle_conv.2} parent=27 // pred_check_branch
        %1898 = sbr.rel (%p1896) target = $region36
      $region35: #{signle_conv.2} parent=27 // pred_region
        _
      $region36: #{signle_conv.2} parent=27 // pred_fallthru
        _
    $region28: #{signle_conv.2} parent=5 // pred_fallthru
      _
    %p1899 = scmp.le.s32.totalorder 2, %s10
    // Predicated region
    $region37: #{signle_conv.2} parent=5 // pred_check
      %p1900 = pneg %p1899
    $region38: #{signle_conv.2} parent=5 // pred_check_branch
      %1902 = sbr.rel (%p1900) target = $region40
    $region39: #{signle_conv.2} parent=5 // pred_region
      %s1903 = ssub.s32 %s10, 2
      // Predicated region
      $region41: #{signle_conv.2} parent=39 // pred_check
        %p1904 = pneg %p102
      $region42: #{signle_conv.2} parent=39 // pred_check_branch
        %1906 = sbr.rel (%p1904) target = $region44
      $region43: #{signle_conv.2} parent=39 // pred_region
        %p1907 = scmp.lt.s32.totalorder %s21, 1
        %s1908 = scalar_select %p1907, %s21, 1
        %p1909 = scmp.lt.s32.totalorder %s22, 1
        %s1910 = scalar_select %p1909, %s22, 1
        %s1911 = smul.addr %s1910, 16
        %s1912 = smul.addr %s1908, 32
        %s1913 = sadd.s32 %s1911, %s1912
        %s1914 = smul.addr %s1913, 8
        %s1915 = scalar_lea.vmem %s2, %s1914
      $region44: #{signle_conv.2} parent=39 // pred_fallthru
        _
      // Predicated region
      $region45: #{signle_conv.2} parent=39 // pred_check
        %p1916 = pneg %p130
      $region46: #{signle_conv.2} parent=39 // pred_check_branch
        %1918 = sbr.rel (%p1916) target = $region48
      $region47: #{signle_conv.2} parent=39 // pred_region
        %p1919 = scmp.lt.s32.totalorder %s21, 1
        %s1920 = scalar_select %p1919, %s21, 1
        %p1921 = scmp.lt.s32.totalorder %s22, 1
        %s1922 = scalar_select %p1921, %s22, 1
        %s1923 = smul.addr %s1920, 2
        %s1924 = sadd.s32 %s1922, %s1923
        %s1925 = smul.addr %s1924, 2
        %s1926 = scalar_lea.vmem %s3, %s1925
      $region48: #{signle_conv.2} parent=39 // pred_fallthru
        _
    $region40: #{signle_conv.2} parent=5 // pred_fallthru
      _
  $region6: #{signle_conv.2} parent=0 // loop_footer
    %s14 = sadd.s32 1, %s10
  $region7: #{signle_conv.2} parent=0 // loop_footer_branch
    %9 = sbr.rel target = $region3
  $region8: #{signle_conv.2} parent=0 // loop_exit
    _

</llo_original>
